<compile_context>
chip_gen: v6e
topology: v6e:2x2x1
jax: 0.10.0
libtpu: 0.0.40
codegen_flags: <defaults>
</compile_context>

<pallas_src>
import functools

import jax
import jax.numpy as jnp
from jax import lax
from jax.experimental import pallas as pl
from jax.experimental.pallas import tpu as pltpu


def _round_up(x, m):
    return (x + m - 1) // m * m


def corn_kernel(inp_ref, wz_ref, wy_ref, out_ref, hz_scr, hy_scr, *,
                dt, gamma, epsilon, tt, seq_len, unroll):
    """One grid step = `tt` coRNN timesteps for one batch block.

    inp_ref: (TT, TB, Hp) f32  precomputed i2h inputs for this time chunk
    wz_ref:  (Hp, Hp)     f32  rows of W_hh^T that multiply hz
    wy_ref:  (Hp, Hp)     f32  rows of W_hh^T that multiply hy
    out_ref: (TB, Hp)     f32  final hy (written on the last time chunk)
    hz_scr/hy_scr: (TB, Hp) f32 carry scratch across time chunks
    """
    c = pl.program_id(1)

    @pl.when(c == 0)
    def _():
        hz_scr[...] = jnp.zeros_like(hz_scr)
        hy_scr[...] = jnp.zeros_like(hy_scr)

    # Hoisted out of the (partially) unrolled loop.
    wz = wz_ref[...]
    wy = wy_ref[...]
    base_t = c * tt
    needs_mask = (seq_len % tt) != 0          # static Python bool

    def body(i, carry):
        hz, hy = carry
        # Split h2h: two MXU dots, no per-step concat of the carried state.
        pre = (jnp.dot(hz, wz, preferred_element_type=jnp.float32)
               + jnp.dot(hy, wy, preferred_element_type=jnp.float32)
               + inp_ref[i])
        if needs_mask:
            # Padded tail timesteps: dt_i == 0 freezes the state exactly,
            # replacing a full-state vselect with scalar math.
            dt_i = dt * (base_t + i < seq_len).astype(jnp.float32)
        else:
            dt_i = dt
        hz_new = hz + dt_i * (jnp.tanh(pre) - gamma * hy - epsilon * hz)
        hy_new = hy + dt_i * hz_new
        return (hz_new, hy_new)

    hz, hy = lax.fori_loop(0, tt, body, (hz_scr[...], hy_scr[...]),
                           unroll=unroll)
    hz_scr[...] = hz
    hy_scr[...] = hy

    @pl.when(c == pl.num_programs(1) - 1)
    def _():
        out_ref[...] = hy


def rnn_model_forward(text, text_lengths, params, *, dt, gamma, epsilon,
                      time_chunk=32):
    """Pallas implementation of RNNModel.forward. `text_lengths` is unused,
    matching the PyTorch forward (it never reads it)."""
    del text_lengths

    emb_table = params["embedding"]                 # (V, E), pad row zeroed
    x = emb_table[text]                             # (T, B, E) gather (XLA glue)
    T, B, _ = x.shape
    H = params["w_hh"].shape[0]

    # --- hoisted i2h: one big batched matmul, off the serial critical path ---
    inputs = (x @ params["w_ih"].T + params["b_ih"]).astype(jnp.float32)  # (T,B,H)

    # --- lane/MXU-friendly padding -------------------------------------------
    Hp = _round_up(H, 128)
    Bp = _round_up(B, 16)
    if Bp > 128:
        # Cap the batch block so the carried state + dot temporaries stay in
        # vregs; extra rows become extra blocks on the "parallel" grid axis
        # (splits across v7x's two TensorCores only when throughput-bound).
        TB = 128
        Bp = _round_up(Bp, TB)
    else:
        TB = Bp
    num_batch_blocks = Bp // TB

    TT = max(1, min(time_chunk, T))
    # Keep the double-buffered f32 input stream under ~8 MiB of VMEM
    # (comfortably inside v7x's 64 MiB even with weights/outputs/scratch).
    max_tt = max(1, (8 * 1024 * 1024) // (2 * TB * Hp * 4))
    TT = min(TT, max_tt)
    num_chunks = pl.cdiv(T, TT)
    Tp = num_chunks * TT
    unroll = min(8, TT)

    # Single pad in the target dtype (no zeros + set + astype round trip).
    inputs_pad = jnp.pad(inputs, ((0, Tp - T), (0, Bp - B), (0, Hp - H)))

    whh_t = params["w_hh"].T.astype(jnp.float32)    # (2H, H)
    wz_pad = jnp.pad(whh_t[:H], ((0, Hp - H), (0, Hp - H)))   # multiplies hz
    wy_pad = jnp.pad(whh_t[H:], ((0, Hp - H), (0, Hp - H)))   # multiplies hy

    kernel = functools.partial(corn_kernel, dt=dt, gamma=gamma, epsilon=epsilon,
                               tt=TT, seq_len=T, unroll=unroll)

    # VMEM budget: double-buffered streams + weights + scratch, 2x headroom.
    vmem_bytes = (2 * TT * TB * Hp * 4        # input chunk (f32, 2 buffers)
                  + 2 * 2 * Hp * Hp * 4       # Wz + Wy     (f32, 2 buffers each)
                  + 2 * TB * Hp * 4           # hy output   (f32, 2 buffers)
                  + 2 * TB * Hp * 4)          # hz/hy carry scratch (f32)
    vmem_limit = int(min(max(2 * vmem_bytes, 16 * 1024 * 1024),
                         48 * 1024 * 1024))

    hy_pad = pl.pallas_call(
        kernel,
        out_shape=jax.ShapeDtypeStruct((Bp, Hp), jnp.float32),
        grid_spec=pltpu.PrefetchScalarGridSpec(
            num_scalar_prefetch=0,
            grid=(num_batch_blocks, num_chunks),
            in_specs=[
                pl.BlockSpec((TT, TB, Hp), lambda b, c: (c, b, 0)),   # inputs
                # Wz/Wy have constant index maps; their second pipeline buffer
                # only matters once Hp/TT scale toward v7x's 64 MiB VMEM
                # (single-buffering them is a future knob, negligible here).
                pl.BlockSpec((Hp, Hp), lambda b, c: (0, 0)),          # Wz
                pl.BlockSpec((Hp, Hp), lambda b, c: (0, 0)),          # Wy
            ],
            out_specs=pl.BlockSpec((TB, Hp), lambda b, c: (b, 0)),
            scratch_shapes=[
                pltpu.VMEM((TB, Hp), jnp.float32),                    # hz carry
                pltpu.VMEM((TB, Hp), jnp.float32),                    # hy carry
            ],
        ),
        compiler_params=pltpu.CompilerParams(
            dimension_semantics=("parallel", "arbitrary"),
            vmem_limit_bytes=vmem_limit),
    )(inputs_pad, wz_pad, wy_pad)

    hy = hy_pad[:B, :H]
    # Readout in XLA: O=2 would be heavily lane-masked inside the kernel.
    return hy @ params["w_ro"].T + params["b_ro"]


def rnn_model_reference(text, params, *, dt, gamma, epsilon):
    """Pure-JAX f32 reference mirroring the PyTorch forward."""
    x = params["embedding"][text]                        # (T, B, E)
    _, B, _ = x.shape
    H = params["w_hh"].shape[0]
    inputs = x @ params["w_ih"].T + params["b_ih"]       # (T, B, H)
    hy = jnp.zeros((B, H), jnp.float32)
    hz = jnp.zeros((B, H), jnp.float32)

    def step(carry, inp_t):
        hy, hz = carry
        pre = jnp.concatenate([hz, hy], axis=1) @ params["w_hh"].T + inp_t
        hz = hz + dt * (jnp.tanh(pre) - gamma * hy - epsilon * hz)
        hy = hy + dt * hz
        return (hy, hz), None

    (hy, hz), _ = jax.lax.scan(step, (hy, hz), inputs)
    return hy @ params["w_ro"].T + params["b_ro"]


if __name__ == "__main__":
    # Small, module-consistent shapes.
    VOCAB, EMB, HID, OUT, PAD_IDX = 50, 32, 32, 2, 1
    T, B = 8, 8
    DT, GAMMA, EPSILON = 0.05, 1.0, 1.0

    key = jax.random.PRNGKey(0)
    (k_emb, k_ih, k_bih, k_hh, k_ro, k_bro,
     k_txt, k_len, k_txt2) = jax.random.split(key, 9)

    emb = jax.random.normal(k_emb, (VOCAB, EMB), jnp.float32) * 0.1
    emb = emb.at[PAD_IDX].set(0.0)                      # padding_idx row = 0
    params = {
        "embedding": emb,
        "w_ih": jax.random.normal(k_ih, (HID, EMB), jnp.float32) * 0.1,
        "b_ih": jax.random.normal(k_bih, (HID,), jnp.float32) * 0.1,
        "w_hh": jax.random.normal(k_hh, (HID, 2 * HID), jnp.float32) * 0.1,  # bias=False
        "w_ro": jax.random.normal(k_ro, (OUT, HID), jnp.float32) * 0.1,
        "b_ro": jax.random.normal(k_bro, (OUT,), jnp.float32) * 0.1,
    }

    text = jax.random.randint(k_txt, (T, B), 0, VOCAB, dtype=jnp.int32)
    # TODO(synk): text_lengths is unused, matching the PyTorch forward (it
    # never reads it); padded tokens still drive the recurrence.
    text_lengths = jax.random.randint(k_len, (B,), 1, T + 1, dtype=jnp.int32)

    ref = rnn_model_reference(text, params, dt=DT, gamma=GAMMA, epsilon=EPSILON)

    # Case 1: T <= time_chunk (single chunk, fully unrolled, no tail masking).
    out = rnn_model_forward(text, text_lengths, params,
                            dt=DT, gamma=GAMMA, epsilon=EPSILON)
    out = jax.block_until_ready(out)
    assert out.shape == (B, OUT)
    assert jnp.allclose(out, ref, atol=5e-3, rtol=2e-2), "mismatch vs reference"

    # Case 2: T not divisible by the time chunk (dt-scaled tail freeze).
    out2 = rnn_model_forward(text, text_lengths, params,
                             dt=DT, gamma=GAMMA, epsilon=EPSILON, time_chunk=5)
    out2 = jax.block_until_ready(out2)
    assert jnp.allclose(out2, ref, atol=5e-3, rtol=2e-2), "mismatch (tail mask)"

    # Case 3: longer sequence — multiple time chunks, tail, partial unroll;
    # also checks the f32 carry doesn't drift over many steps.
    T_LONG = 100
    text_long = jax.random.randint(k_txt2, (T_LONG, B), 0, VOCAB, dtype=jnp.int32)
    ref_long = rnn_model_reference(text_long, params, dt=DT, gamma=GAMMA,
                                   epsilon=EPSILON)
    out3 = rnn_model_forward(text_long, text_lengths, params,
                             dt=DT, gamma=GAMMA, epsilon=EPSILON, time_chunk=32)
    out3 = jax.block_until_ready(out3)
    assert out3.shape == (B, OUT)
    assert jnp.allclose(out3, ref_long, atol=5e-3, rtol=2e-2), "mismatch (long seq)"

    print("KERNEL_OK")
</pallas_src>

<mosaic_0001>
module attributes {stable_mosaic.version = 11 : i64} {
  func.func @corn_kernel(%arg0: i32, %arg1: i32, %arg2: memref<8x16x128xf32, #tpu.memory_space<vmem>>, %arg3: memref<128x128xf32, #tpu.memory_space<vmem>>, %arg4: memref<128x128xf32, #tpu.memory_space<vmem>>, %arg5: memref<16x128xf32, #tpu.memory_space<vmem>>, %arg6: memref<16x128xf32, #tpu.memory_space<vmem>>, %arg7: memref<16x128xf32, #tpu.memory_space<vmem>>) attributes {dimension_semantics = [#tpu.dimension_semantics<parallel>, #tpu.dimension_semantics<arbitrary>], iteration_bounds = array<i64: 1, 1>, scalar_prefetch = 0 : i64, scratch_operands = 2 : i64, tpu.core_type = #tpu.core_type<tc>, window_params = [{transform_indices = @transform_0, window_bounds = array<i64: 8, 16, 128>}, {pipeline_mode = #tpu.pipeline_mode<synchronous>, transform_indices = @transform_1, window_bounds = array<i64: 128, 128>}, {pipeline_mode = #tpu.pipeline_mode<synchronous>, transform_indices = @transform_2, window_bounds = array<i64: 128, 128>}, {transform_indices = @transform_3, window_bounds = array<i64: 16, 128>}]} {
    %c0_i32 = arith.constant 0 : i32
    %0 = arith.cmpi eq, %arg1, %c0_i32 : i32
    %1 = arith.extui %0 : i1 to i32
    %c0_i32_0 = arith.constant 0 : i32
    %2 = arith.cmpi ne, %1, %c0_i32_0 : i32
    scf.if %2 {
      %cst_78 = arith.constant 0.000000e+00 : f32
      %172 = vector.broadcast %cst_78 : f32 to vector<16x128xf32>
      %c0_79 = arith.constant 0 : index
      %c0_80 = arith.constant 0 : index
      %173 = vector.load %arg6[%c0_79, %c0_80] : memref<16x128xf32, #tpu.memory_space<vmem>>, vector<16x128xf32>
      tpu.vector_store %arg6[%c0_79, %c0_80], %172 {strides = array<i32>} : memref<16x128xf32, #tpu.memory_space<vmem>>, vector<16x128xf32>,
      %cst_81 = arith.constant 0.000000e+00 : f32
      %174 = vector.broadcast %cst_81 : f32 to vector<16x128xf32>
      %c0_82 = arith.constant 0 : index
      %c0_83 = arith.constant 0 : index
      %175 = vector.load %arg7[%c0_82, %c0_83] : memref<16x128xf32, #tpu.memory_space<vmem>>, vector<16x128xf32>
      tpu.vector_store %arg7[%c0_82, %c0_83], %174 {strides = array<i32>} : memref<16x128xf32, #tpu.memory_space<vmem>>, vector<16x128xf32>,
    } else {
    }
    %c0 = arith.constant 0 : index
    %c0_1 = arith.constant 0 : index
    %3 = vector.load %arg3[%c0, %c0_1] : memref<128x128xf32, #tpu.memory_space<vmem>>, vector<128x128xf32>
    %c0_2 = arith.constant 0 : index
    %c0_3 = arith.constant 0 : index
    %4 = vector.load %arg4[%c0_2, %c0_3] : memref<128x128xf32, #tpu.memory_space<vmem>>, vector<128x128xf32>
    %c0_4 = arith.constant 0 : index
    %c0_5 = arith.constant 0 : index
    %5 = vector.load %arg6[%c0_4, %c0_5] : memref<16x128xf32, #tpu.memory_space<vmem>>, vector<16x128xf32>
    %c0_6 = arith.constant 0 : index
    %c0_7 = arith.constant 0 : index
    %6 = vector.load %arg7[%c0_6, %c0_7] : memref<16x128xf32, #tpu.memory_space<vmem>>, vector<16x128xf32>
    %c0_i32_8 = arith.constant 0 : i32
    %cst = arith.constant dense<0.000000e+00> : vector<16x128xf32>
    %7 = tpu.matmul %5, %3, %cst {dimension_numbers = #tpu.dot_dimension_numbers<[1], [0], [0], [1], [0, 0, 1, 1], [], []>} : vector<16x128xf32>, vector<128x128xf32>, vector<16x128xf32> -> vector<16x128xf32>
    %cst_9 = arith.constant dense<0.000000e+00> : vector<16x128xf32>
    %8 = tpu.matmul %6, %4, %cst_9 {dimension_numbers = #tpu.dot_dimension_numbers<[1], [0], [0], [1], [0, 0, 1, 1], [], []>} : vector<16x128xf32>, vector<128x128xf32>, vector<16x128xf32> -> vector<16x128xf32>
    %9 = arith.addf %7, %8 : vector<16x128xf32>
    %10 = arith.index_cast %c0_i32_8 : i32 to index
    %c0_10 = arith.constant 0 : index
    %c0_11 = arith.constant 0 : index
    %11 = vector.load %arg2[%10, %c0_10, %c0_11] : memref<8x16x128xf32, #tpu.memory_space<vmem>>, vector<1x16x128xf32>
    %12 = vector.shape_cast %11 : vector<1x16x128xf32> to vector<16x128xf32>
    %13 = arith.addf %9, %12 : vector<16x128xf32>
    %14 = math.tanh %13 : vector<16x128xf32>
    %cst_12 = arith.constant 1.000000e+00 : f32
    %15 = vector.broadcast %cst_12 : f32 to vector<16x128xf32>
    %16 = arith.mulf %15, %6 : vector<16x128xf32>
    %17 = arith.subf %14, %16 : vector<16x128xf32>
    %cst_13 = arith.constant 1.000000e+00 : f32
    %18 = vector.broadcast %cst_13 : f32 to vector<16x128xf32>
    %19 = arith.mulf %18, %5 : vector<16x128xf32>
    %20 = arith.subf %17, %19 : vector<16x128xf32>
    %cst_14 = arith.constant 5.000000e-02 : f32
    %21 = vector.broadcast %cst_14 : f32 to vector<16x128xf32>
    %22 = arith.mulf %21, %20 : vector<16x128xf32>
    %23 = arith.addf %5, %22 : vector<16x128xf32>
    %cst_15 = arith.constant 5.000000e-02 : f32
    %24 = vector.broadcast %cst_15 : f32 to vector<16x128xf32>
    %25 = arith.mulf %24, %23 : vector<16x128xf32>
    %26 = arith.addf %6, %25 : vector<16x128xf32>
    %c1_i32 = arith.constant 1 : i32
    %cst_16 = arith.constant dense<0.000000e+00> : vector<16x128xf32>
    %27 = tpu.matmul %23, %3, %cst_16 {dimension_numbers = #tpu.dot_dimension_numbers<[1], [0], [0], [1], [0, 0, 1, 1], [], []>} : vector<16x128xf32>, vector<128x128xf32>, vector<16x128xf32> -> vector<16x128xf32>
    %cst_17 = arith.constant dense<0.000000e+00> : vector<16x128xf32>
    %28 = tpu.matmul %26, %4, %cst_17 {dimension_numbers = #tpu.dot_dimension_numbers<[1], [0], [0], [1], [0, 0, 1, 1], [], []>} : vector<16x128xf32>, vector<128x128xf32>, vector<16x128xf32> -> vector<16x128xf32>
    %29 = arith.addf %27, %28 : vector<16x128xf32>
    %30 = arith.index_cast %c1_i32 : i32 to index
    %c0_18 = arith.constant 0 : index
    %c0_19 = arith.constant 0 : index
    %31 = vector.load %arg2[%30, %c0_18, %c0_19] : memref<8x16x128xf32, #tpu.memory_space<vmem>>, vector<1x16x128xf32>
    %32 = vector.shape_cast %31 : vector<1x16x128xf32> to vector<16x128xf32>
    %33 = arith.addf %29, %32 : vector<16x128xf32>
    %34 = math.tanh %33 : vector<16x128xf32>
    %cst_20 = arith.constant 1.000000e+00 : f32
    %35 = vector.broadcast %cst_20 : f32 to vector<16x128xf32>
    %36 = arith.mulf %35, %26 : vector<16x128xf32>
    %37 = arith.subf %34, %36 : vector<16x128xf32>
    %cst_21 = arith.constant 1.000000e+00 : f32
    %38 = vector.broadcast %cst_21 : f32 to vector<16x128xf32>
    %39 = arith.mulf %38, %23 : vector<16x128xf32>
    %40 = arith.subf %37, %39 : vector<16x128xf32>
    %cst_22 = arith.constant 5.000000e-02 : f32
    %41 = vector.broadcast %cst_22 : f32 to vector<16x128xf32>
    %42 = arith.mulf %41, %40 : vector<16x128xf32>
    %43 = arith.addf %23, %42 : vector<16x128xf32>
    %cst_23 = arith.constant 5.000000e-02 : f32
    %44 = vector.broadcast %cst_23 : f32 to vector<16x128xf32>
    %45 = arith.mulf %44, %43 : vector<16x128xf32>
    %46 = arith.addf %26, %45 : vector<16x128xf32>
    %c2_i32 = arith.constant 2 : i32
    %cst_24 = arith.constant dense<0.000000e+00> : vector<16x128xf32>
    %47 = tpu.matmul %43, %3, %cst_24 {dimension_numbers = #tpu.dot_dimension_numbers<[1], [0], [0], [1], [0, 0, 1, 1], [], []>} : vector<16x128xf32>, vector<128x128xf32>, vector<16x128xf32> -> vector<16x128xf32>
    %cst_25 = arith.constant dense<0.000000e+00> : vector<16x128xf32>
    %48 = tpu.matmul %46, %4, %cst_25 {dimension_numbers = #tpu.dot_dimension_numbers<[1], [0], [0], [1], [0, 0, 1, 1], [], []>} : vector<16x128xf32>, vector<128x128xf32>, vector<16x128xf32> -> vector<16x128xf32>
    %49 = arith.addf %47, %48 : vector<16x128xf32>
    %50 = arith.index_cast %c2_i32 : i32 to index
    %c0_26 = arith.constant 0 : index
    %c0_27 = arith.constant 0 : index
    %51 = vector.load %arg2[%50, %c0_26, %c0_27] : memref<8x16x128xf32, #tpu.memory_space<vmem>>, vector<1x16x128xf32>
    %52 = vector.shape_cast %51 : vector<1x16x128xf32> to vector<16x128xf32>
    %53 = arith.addf %49, %52 : vector<16x128xf32>
    %54 = math.tanh %53 : vector<16x128xf32>
    %cst_28 = arith.constant 1.000000e+00 : f32
    %55 = vector.broadcast %cst_28 : f32 to vector<16x128xf32>
    %56 = arith.mulf %55, %46 : vector<16x128xf32>
    %57 = arith.subf %54, %56 : vector<16x128xf32>
    %cst_29 = arith.constant 1.000000e+00 : f32
    %58 = vector.broadcast %cst_29 : f32 to vector<16x128xf32>
    %59 = arith.mulf %58, %43 : vector<16x128xf32>
    %60 = arith.subf %57, %59 : vector<16x128xf32>
    %cst_30 = arith.constant 5.000000e-02 : f32
    %61 = vector.broadcast %cst_30 : f32 to vector<16x128xf32>
    %62 = arith.mulf %61, %60 : vector<16x128xf32>
    %63 = arith.addf %43, %62 : vector<16x128xf32>
    %cst_31 = arith.constant 5.000000e-02 : f32
    %64 = vector.broadcast %cst_31 : f32 to vector<16x128xf32>
    %65 = arith.mulf %64, %63 : vector<16x128xf32>
    %66 = arith.addf %46, %65 : vector<16x128xf32>
    %c3_i32 = arith.constant 3 : i32
    %cst_32 = arith.constant dense<0.000000e+00> : vector<16x128xf32>
    %67 = tpu.matmul %63, %3, %cst_32 {dimension_numbers = #tpu.dot_dimension_numbers<[1], [0], [0], [1], [0, 0, 1, 1], [], []>} : vector<16x128xf32>, vector<128x128xf32>, vector<16x128xf32> -> vector<16x128xf32>
    %cst_33 = arith.constant dense<0.000000e+00> : vector<16x128xf32>
    %68 = tpu.matmul %66, %4, %cst_33 {dimension_numbers = #tpu.dot_dimension_numbers<[1], [0], [0], [1], [0, 0, 1, 1], [], []>} : vector<16x128xf32>, vector<128x128xf32>, vector<16x128xf32> -> vector<16x128xf32>
    %69 = arith.addf %67, %68 : vector<16x128xf32>
    %70 = arith.index_cast %c3_i32 : i32 to index
    %c0_34 = arith.constant 0 : index
    %c0_35 = arith.constant 0 : index
    %71 = vector.load %arg2[%70, %c0_34, %c0_35] : memref<8x16x128xf32, #tpu.memory_space<vmem>>, vector<1x16x128xf32>
    %72 = vector.shape_cast %71 : vector<1x16x128xf32> to vector<16x128xf32>
    %73 = arith.addf %69, %72 : vector<16x128xf32>
    %74 = math.tanh %73 : vector<16x128xf32>
    %cst_36 = arith.constant 1.000000e+00 : f32
    %75 = vector.broadcast %cst_36 : f32 to vector<16x128xf32>
    %76 = arith.mulf %75, %66 : vector<16x128xf32>
    %77 = arith.subf %74, %76 : vector<16x128xf32>
    %cst_37 = arith.constant 1.000000e+00 : f32
    %78 = vector.broadcast %cst_37 : f32 to vector<16x128xf32>
    %79 = arith.mulf %78, %63 : vector<16x128xf32>
    %80 = arith.subf %77, %79 : vector<16x128xf32>
    %cst_38 = arith.constant 5.000000e-02 : f32
    %81 = vector.broadcast %cst_38 : f32 to vector<16x128xf32>
    %82 = arith.mulf %81, %80 : vector<16x128xf32>
    %83 = arith.addf %63, %82 : vector<16x128xf32>
    %cst_39 = arith.constant 5.000000e-02 : f32
    %84 = vector.broadcast %cst_39 : f32 to vector<16x128xf32>
    %85 = arith.mulf %84, %83 : vector<16x128xf32>
    %86 = arith.addf %66, %85 : vector<16x128xf32>
    %c4_i32 = arith.constant 4 : i32
    %cst_40 = arith.constant dense<0.000000e+00> : vector<16x128xf32>
    %87 = tpu.matmul %83, %3, %cst_40 {dimension_numbers = #tpu.dot_dimension_numbers<[1], [0], [0], [1], [0, 0, 1, 1], [], []>} : vector<16x128xf32>, vector<128x128xf32>, vector<16x128xf32> -> vector<16x128xf32>
    %cst_41 = arith.constant dense<0.000000e+00> : vector<16x128xf32>
    %88 = tpu.matmul %86, %4, %cst_41 {dimension_numbers = #tpu.dot_dimension_numbers<[1], [0], [0], [1], [0, 0, 1, 1], [], []>} : vector<16x128xf32>, vector<128x128xf32>, vector<16x128xf32> -> vector<16x128xf32>
    %89 = arith.addf %87, %88 : vector<16x128xf32>
    %90 = arith.index_cast %c4_i32 : i32 to index
    %c0_42 = arith.constant 0 : index
    %c0_43 = arith.constant 0 : index
    %91 = vector.load %arg2[%90, %c0_42, %c0_43] : memref<8x16x128xf32, #tpu.memory_space<vmem>>, vector<1x16x128xf32>
    %92 = vector.shape_cast %91 : vector<1x16x128xf32> to vector<16x128xf32>
    %93 = arith.addf %89, %92 : vector<16x128xf32>
    %94 = math.tanh %93 : vector<16x128xf32>
    %cst_44 = arith.constant 1.000000e+00 : f32
    %95 = vector.broadcast %cst_44 : f32 to vector<16x128xf32>
    %96 = arith.mulf %95, %86 : vector<16x128xf32>
    %97 = arith.subf %94, %96 : vector<16x128xf32>
    %cst_45 = arith.constant 1.000000e+00 : f32
    %98 = vector.broadcast %cst_45 : f32 to vector<16x128xf32>
    %99 = arith.mulf %98, %83 : vector<16x128xf32>
    %100 = arith.subf %97, %99 : vector<16x128xf32>
    %cst_46 = arith.constant 5.000000e-02 : f32
    %101 = vector.broadcast %cst_46 : f32 to vector<16x128xf32>
    %102 = arith.mulf %101, %100 : vector<16x128xf32>
    %103 = arith.addf %83, %102 : vector<16x128xf32>
    %cst_47 = arith.constant 5.000000e-02 : f32
    %104 = vector.broadcast %cst_47 : f32 to vector<16x128xf32>
    %105 = arith.mulf %104, %103 : vector<16x128xf32>
    %106 = arith.addf %86, %105 : vector<16x128xf32>
    %c5_i32 = arith.constant 5 : i32
    %cst_48 = arith.constant dense<0.000000e+00> : vector<16x128xf32>
    %107 = tpu.matmul %103, %3, %cst_48 {dimension_numbers = #tpu.dot_dimension_numbers<[1], [0], [0], [1], [0, 0, 1, 1], [], []>} : vector<16x128xf32>, vector<128x128xf32>, vector<16x128xf32> -> vector<16x128xf32>
    %cst_49 = arith.constant dense<0.000000e+00> : vector<16x128xf32>
    %108 = tpu.matmul %106, %4, %cst_49 {dimension_numbers = #tpu.dot_dimension_numbers<[1], [0], [0], [1], [0, 0, 1, 1], [], []>} : vector<16x128xf32>, vector<128x128xf32>, vector<16x128xf32> -> vector<16x128xf32>
    %109 = arith.addf %107, %108 : vector<16x128xf32>
    %110 = arith.index_cast %c5_i32 : i32 to index
    %c0_50 = arith.constant 0 : index
    %c0_51 = arith.constant 0 : index
    %111 = vector.load %arg2[%110, %c0_50, %c0_51] : memref<8x16x128xf32, #tpu.memory_space<vmem>>, vector<1x16x128xf32>
    %112 = vector.shape_cast %111 : vector<1x16x128xf32> to vector<16x128xf32>
    %113 = arith.addf %109, %112 : vector<16x128xf32>
    %114 = math.tanh %113 : vector<16x128xf32>
    %cst_52 = arith.constant 1.000000e+00 : f32
    %115 = vector.broadcast %cst_52 : f32 to vector<16x128xf32>
    %116 = arith.mulf %115, %106 : vector<16x128xf32>
    %117 = arith.subf %114, %116 : vector<16x128xf32>
    %cst_53 = arith.constant 1.000000e+00 : f32
    %118 = vector.broadcast %cst_53 : f32 to vector<16x128xf32>
    %119 = arith.mulf %118, %103 : vector<16x128xf32>
    %120 = arith.subf %117, %119 : vector<16x128xf32>
    %cst_54 = arith.constant 5.000000e-02 : f32
    %121 = vector.broadcast %cst_54 : f32 to vector<16x128xf32>
    %122 = arith.mulf %121, %120 : vector<16x128xf32>
    %123 = arith.addf %103, %122 : vector<16x128xf32>
    %cst_55 = arith.constant 5.000000e-02 : f32
    %124 = vector.broadcast %cst_55 : f32 to vector<16x128xf32>
    %125 = arith.mulf %124, %123 : vector<16x128xf32>
    %126 = arith.addf %106, %125 : vector<16x128xf32>
    %c6_i32 = arith.constant 6 : i32
    %cst_56 = arith.constant dense<0.000000e+00> : vector<16x128xf32>
    %127 = tpu.matmul %123, %3, %cst_56 {dimension_numbers = #tpu.dot_dimension_numbers<[1], [0], [0], [1], [0, 0, 1, 1], [], []>} : vector<16x128xf32>, vector<128x128xf32>, vector<16x128xf32> -> vector<16x128xf32>
    %cst_57 = arith.constant dense<0.000000e+00> : vector<16x128xf32>
    %128 = tpu.matmul %126, %4, %cst_57 {dimension_numbers = #tpu.dot_dimension_numbers<[1], [0], [0], [1], [0, 0, 1, 1], [], []>} : vector<16x128xf32>, vector<128x128xf32>, vector<16x128xf32> -> vector<16x128xf32>
    %129 = arith.addf %127, %128 : vector<16x128xf32>
    %130 = arith.index_cast %c6_i32 : i32 to index
    %c0_58 = arith.constant 0 : index
    %c0_59 = arith.constant 0 : index
    %131 = vector.load %arg2[%130, %c0_58, %c0_59] : memref<8x16x128xf32, #tpu.memory_space<vmem>>, vector<1x16x128xf32>
    %132 = vector.shape_cast %131 : vector<1x16x128xf32> to vector<16x128xf32>
    %133 = arith.addf %129, %132 : vector<16x128xf32>
    %134 = math.tanh %133 : vector<16x128xf32>
    %cst_60 = arith.constant 1.000000e+00 : f32
    %135 = vector.broadcast %cst_60 : f32 to vector<16x128xf32>
    %136 = arith.mulf %135, %126 : vector<16x128xf32>
    %137 = arith.subf %134, %136 : vector<16x128xf32>
    %cst_61 = arith.constant 1.000000e+00 : f32
    %138 = vector.broadcast %cst_61 : f32 to vector<16x128xf32>
    %139 = arith.mulf %138, %123 : vector<16x128xf32>
    %140 = arith.subf %137, %139 : vector<16x128xf32>
    %cst_62 = arith.constant 5.000000e-02 : f32
    %141 = vector.broadcast %cst_62 : f32 to vector<16x128xf32>
    %142 = arith.mulf %141, %140 : vector<16x128xf32>
    %143 = arith.addf %123, %142 : vector<16x128xf32>
    %cst_63 = arith.constant 5.000000e-02 : f32
    %144 = vector.broadcast %cst_63 : f32 to vector<16x128xf32>
    %145 = arith.mulf %144, %143 : vector<16x128xf32>
    %146 = arith.addf %126, %145 : vector<16x128xf32>
    %c7_i32 = arith.constant 7 : i32
    %cst_64 = arith.constant dense<0.000000e+00> : vector<16x128xf32>
    %147 = tpu.matmul %143, %3, %cst_64 {dimension_numbers = #tpu.dot_dimension_numbers<[1], [0], [0], [1], [0, 0, 1, 1], [], []>} : vector<16x128xf32>, vector<128x128xf32>, vector<16x128xf32> -> vector<16x128xf32>
    %cst_65 = arith.constant dense<0.000000e+00> : vector<16x128xf32>
    %148 = tpu.matmul %146, %4, %cst_65 {dimension_numbers = #tpu.dot_dimension_numbers<[1], [0], [0], [1], [0, 0, 1, 1], [], []>} : vector<16x128xf32>, vector<128x128xf32>, vector<16x128xf32> -> vector<16x128xf32>
    %149 = arith.addf %147, %148 : vector<16x128xf32>
    %150 = arith.index_cast %c7_i32 : i32 to index
    %c0_66 = arith.constant 0 : index
    %c0_67 = arith.constant 0 : index
    %151 = vector.load %arg2[%150, %c0_66, %c0_67] : memref<8x16x128xf32, #tpu.memory_space<vmem>>, vector<1x16x128xf32>
    %152 = vector.shape_cast %151 : vector<1x16x128xf32> to vector<16x128xf32>
    %153 = arith.addf %149, %152 : vector<16x128xf32>
    %154 = math.tanh %153 : vector<16x128xf32>
    %cst_68 = arith.constant 1.000000e+00 : f32
    %155 = vector.broadcast %cst_68 : f32 to vector<16x128xf32>
    %156 = arith.mulf %155, %146 : vector<16x128xf32>
    %157 = arith.subf %154, %156 : vector<16x128xf32>
    %cst_69 = arith.constant 1.000000e+00 : f32
    %158 = vector.broadcast %cst_69 : f32 to vector<16x128xf32>
    %159 = arith.mulf %158, %143 : vector<16x128xf32>
    %160 = arith.subf %157, %159 : vector<16x128xf32>
    %cst_70 = arith.constant 5.000000e-02 : f32
    %161 = vector.broadcast %cst_70 : f32 to vector<16x128xf32>
    %162 = arith.mulf %161, %160 : vector<16x128xf32>
    %163 = arith.addf %143, %162 : vector<16x128xf32>
    %cst_71 = arith.constant 5.000000e-02 : f32
    %164 = vector.broadcast %cst_71 : f32 to vector<16x128xf32>
    %165 = arith.mulf %164, %163 : vector<16x128xf32>
    %166 = arith.addf %146, %165 : vector<16x128xf32>
    %c8_i32 = arith.constant 8 : i32
    %c0_72 = arith.constant 0 : index
    %c0_73 = arith.constant 0 : index
    %167 = vector.load %arg6[%c0_72, %c0_73] : memref<16x128xf32, #tpu.memory_space<vmem>>, vector<16x128xf32>
    tpu.vector_store %arg6[%c0_72, %c0_73], %163 {strides = array<i32>} : memref<16x128xf32, #tpu.memory_space<vmem>>, vector<16x128xf32>,
    %c0_74 = arith.constant 0 : index
    %c0_75 = arith.constant 0 : index
    %168 = vector.load %arg7[%c0_74, %c0_75] : memref<16x128xf32, #tpu.memory_space<vmem>>, vector<16x128xf32>
    tpu.vector_store %arg7[%c0_74, %c0_75], %166 {strides = array<i32>} : memref<16x128xf32, #tpu.memory_space<vmem>>, vector<16x128xf32>,
    %c0_i32_76 = arith.constant 0 : i32
    %169 = arith.cmpi eq, %arg1, %c0_i32_76 : i32
    %170 = arith.extui %169 : i1 to i32
    %c0_i32_77 = arith.constant 0 : i32
    %171 = arith.cmpi ne, %170, %c0_i32_77 : i32
    scf.if %171 {
      %c0_78 = arith.constant 0 : index
      %c0_79 = arith.constant 0 : index
      %172 = vector.load %arg5[%c0_78, %c0_79] : memref<16x128xf32, #tpu.memory_space<vmem>>, vector<16x128xf32>
      tpu.vector_store %arg5[%c0_78, %c0_79], %166 {strides = array<i32>} : memref<16x128xf32, #tpu.memory_space<vmem>>, vector<16x128xf32>,
    } else {
    }
    return
  }
  func.func @transform_0(%arg0: i32, %arg1: i32) -> (i32, i32, i32) {
    %c0_i32 = arith.constant 0 : i32
    %c0_i32_0 = arith.constant 0 : i32
    return %arg1, %arg0, %c0_i32 : i32, i32, i32
  }
  func.func @transform_1(%arg0: i32, %arg1: i32) -> (i32, i32) {
    %c0_i32 = arith.constant 0 : i32
    %c0_i32_0 = arith.constant 0 : i32
    %c0_i32_1 = arith.constant 0 : i32
    return %c0_i32, %c0_i32_0 : i32, i32
  }
  func.func @transform_2(%arg0: i32, %arg1: i32) -> (i32, i32) {
    %c0_i32 = arith.constant 0 : i32
    %c0_i32_0 = arith.constant 0 : i32
    %c0_i32_1 = arith.constant 0 : i32
    return %c0_i32, %c0_i32_0 : i32, i32
  }
  func.func @transform_3(%arg0: i32, %arg1: i32) -> (i32, i32) {
    %c0_i32 = arith.constant 0 : i32
    %c0_i32_0 = arith.constant 0 : i32
    return %arg0, %c0_i32 : i32, i32
  }
}

</mosaic_0001>

<llo_original>
// kernel: tpu_custom_call.1
$region0: #{tpu_custom_call.1}
  #allocation0 [shape = 'u32[]', space=smem, size = 0x4, offset = 0x4, fixed_abs, tag = 'smem constant byte address 0x4 - core index']
  #allocation1 [shape = 'u32[144,128]{1,0:T(1,128)}', space=vmem, size = 0x12000, scoped, tag = 'internal scratch']
  #allocation2 [shape = 'f32[16,128]{1,0:T(8,128)}', space=vmem, size = 0x2000, scoped, tag = 'scratch operand']
  #allocation3 [shape = 'f32[16,128]{1,0:T(8,128)}', space=vmem, size = 0x2000, scoped, tag = 'scratch operand']
  %s0 = inlined_call_operand.hbm [shape: f32[8,16,128], index: 0, kind: input, shape index: {}]
  %s1 = inlined_call_operand.hbm [shape: f32[128,128], index: 1, kind: input, shape index: {}]
  %s2 = inlined_call_operand.hbm [shape: f32[128,128], index: 2, kind: input, shape index: {}]
  %s3 = inlined_call_operand.hbm [shape: f32[16,128], index: 3, kind: output, shape index: {}]
  %s4 = sld [smem:[#allocation0]]
  $region42: #{tpu_custom_call.1} parent=0
    _
  %s6 = ssub.s32 1, %s4
  %s7 = scalar_select 0, %s6, %s4
  $region1: #{tpu_custom_call.1} parent=0
    #allocation4 [shape = 'u8[65536]{0}', space=vmem, size = 0x10000, scoped, tag = 'input window, operand 0, single buffered']
    #allocation5 [shape = 's32[1]{0}', space=sflag, size = 0x4, scoped, tag = 'scoped memory for tpu_custom_call.1']
    #allocation6 [shape = 's32[1]{0}', space=sflag, size = 0x4, scoped, tag = 'scoped memory for tpu_custom_call.1']
    #allocation7 [shape = 'u8[65536]{0}', space=vmem, size = 0x10000, scoped, tag = 'input window, operand 1, single buffered']
    #allocation8 [shape = 's32[1]{0}', space=sflag, size = 0x4, scoped, tag = 'scoped memory for tpu_custom_call.1']
    #allocation9 [shape = 'u8[65536]{0}', space=vmem, size = 0x10000, scoped, tag = 'input window, operand 2, single buffered']
    #allocation10 [shape = 'u8[8192]{0}', space=vmem, size = 0x2000, scoped, tag = 'output window, operand 0, single buffered']
    %8 = vsyncpa [#allocation5], 0
    %9 = vsyncpa [#allocation8], 0
    %10 = vsyncpa [#allocation6], 0
    // Predicated region
    $region2: #{tpu_custom_call.1} parent=1 // pred_check
      _
    $region3: #{tpu_custom_call.1} parent=1 // pred_check_branch
      %12 = sbr.rel (0) target = $region5
    $region4: #{tpu_custom_call.1} parent=1 // pred_region
      %s14 = ssub.s32 2048, 2048
      %15 = vsyncadd [#allocation5], %s14
      %s16 = sshll.u32 [#allocation4], 4
      %s17 = int_to_ptr.vmem [resolvable:$true] %s16
      %22 = dma.hbm_to_vmem [thread:$0]  %s0, 2048, %s17, [#allocation5], 128, 128, 8
    $region5: #{tpu_custom_call.1} parent=1 // pred_fallthru
      _
    // Predicated region
    $region6: #{tpu_custom_call.1} parent=1 // pred_check
      _
    $region7: #{tpu_custom_call.1} parent=1 // pred_check_branch
      %24 = sbr.rel (0) target = $region9
    $region8: #{tpu_custom_call.1} parent=1 // pred_region
      %s26 = ssub.s32 2048, 2048
      %27 = vsyncadd [#allocation8], %s26
      %s28 = sshll.u32 [#allocation7], 4
      %s29 = int_to_ptr.vmem [resolvable:$true] %s28
      %34 = dma.hbm_to_vmem [thread:$0]  %s1, 2048, %s29, [#allocation8], 128, 128, 8
    $region9: #{tpu_custom_call.1} parent=1 // pred_fallthru
      _
    // Predicated region
    $region10: #{tpu_custom_call.1} parent=1 // pred_check
      _
    $region11: #{tpu_custom_call.1} parent=1 // pred_check_branch
      %36 = sbr.rel (0) target = $region13
    $region12: #{tpu_custom_call.1} parent=1 // pred_region
      %s38 = ssub.s32 2048, 2048
      %39 = vsyncadd [#allocation8], %s38
      %s40 = sshll.u32 [#allocation9], 4
      %s41 = int_to_ptr.vmem [resolvable:$true] %s40
      %46 = dma.hbm_to_vmem [thread:$0]  %s2, 2048, %s41, [#allocation8], 128, 128, 8
    $region13: #{tpu_custom_call.1} parent=1 // pred_fallthru
      _
    // Predicated region
    $region14: #{tpu_custom_call.1} parent=1 // pred_check
      _
    $region15: #{tpu_custom_call.1} parent=1 // pred_check_branch
      %48 = sbr.rel (0) target = $region17
    $region16: #{tpu_custom_call.1} parent=1 // pred_region
      %49 = dma.done [#allocation5], 2048
    $region17: #{tpu_custom_call.1} parent=1 // pred_fallthru
      _
    // Predicated region
    $region18: #{tpu_custom_call.1} parent=1 // pred_check
      _
    $region19: #{tpu_custom_call.1} parent=1 // pred_check_branch
      %51 = sbr.rel (0) target = $region21
    $region20: #{tpu_custom_call.1} parent=1 // pred_region
      %52 = dma.done [#allocation8], 2048
    $region21: #{tpu_custom_call.1} parent=1 // pred_fallthru
      _
    // Predicated region
    $region22: #{tpu_custom_call.1} parent=1 // pred_check
      _
    $region23: #{tpu_custom_call.1} parent=1 // pred_check_branch
      %54 = sbr.rel (0) target = $region25
    $region24: #{tpu_custom_call.1} parent=1 // pred_region
      %55 = dma.done [#allocation8], 2048
    $region25: #{tpu_custom_call.1} parent=1 // pred_fallthru
      _
    %p56 = scmp.eq.s32.totalorder 0, 0
    // Predicated region
    $region26: #{tpu_custom_call.1} parent=1 // pred_check
      %p57 = pneg %p56
    $region27: #{tpu_custom_call.1} parent=1 // pred_check_branch
      %59 = sbr.rel (%p57) target = $region29
    $region28: #{tpu_custom_call.1} parent=1 // pred_region
      %60 = vst [vmem:[#allocation2] sm:$0xff] 0.0
      %61 = vst [vmem:[#allocation2 + $0x8] sm:$0xff] 0.0
      %62 = vst [vmem:[#allocation3] sm:$0xff] 0.0
      %63 = vst [vmem:[#allocation3 + $0x8] sm:$0xff] 0.0
    $region29: #{tpu_custom_call.1} parent=1 // pred_fallthru
      _
    %v64 = vld [vmem:[#allocation7] sm:$0xff]
    %v65 = vld [vmem:[#allocation7 + $0x8] sm:$0xff]
    %v66 = vld [vmem:[#allocation7 + $0x10] sm:$0xff]
    %v67 = vld [vmem:[#allocation7 + $0x18] sm:$0xff]
    %v68 = vld [vmem:[#allocation7 + $0x20] sm:$0xff]
    %v69 = vld [vmem:[#allocation7 + $0x28] sm:$0xff]
    %v70 = vld [vmem:[#allocation7 + $0x30] sm:$0xff]
    %v71 = vld [vmem:[#allocation7 + $0x38] sm:$0xff]
    %v72 = vld [vmem:[#allocation7 + $0x40] sm:$0xff]
    %v73 = vld [vmem:[#allocation7 + $0x48] sm:$0xff]
    %v74 = vld [vmem:[#allocation7 + $0x50] sm:$0xff]
    %v75 = vld [vmem:[#allocation7 + $0x58] sm:$0xff]
    %v76 = vld [vmem:[#allocation7 + $0x60] sm:$0xff]
    %v77 = vld [vmem:[#allocation7 + $0x68] sm:$0xff]
    %v78 = vld [vmem:[#allocation7 + $0x70] sm:$0xff]
    %v79 = vld [vmem:[#allocation7 + $0x78] sm:$0xff]
    %v80 = vld [vmem:[#allocation9] sm:$0xff]
    %v81 = vld [vmem:[#allocation9 + $0x8] sm:$0xff]
    %v82 = vld [vmem:[#allocation9 + $0x10] sm:$0xff]
    %v83 = vld [vmem:[#allocation9 + $0x18] sm:$0xff]
    %v84 = vld [vmem:[#allocation9 + $0x20] sm:$0xff]
    %v85 = vld [vmem:[#allocation9 + $0x28] sm:$0xff]
    %v86 = vld [vmem:[#allocation9 + $0x30] sm:$0xff]
    %v87 = vld [vmem:[#allocation9 + $0x38] sm:$0xff]
    %v88 = vld [vmem:[#allocation9 + $0x40] sm:$0xff]
    %v89 = vld [vmem:[#allocation9 + $0x48] sm:$0xff]
    %v90 = vld [vmem:[#allocation9 + $0x50] sm:$0xff]
    %v91 = vld [vmem:[#allocation9 + $0x58] sm:$0xff]
    %v92 = vld [vmem:[#allocation9 + $0x60] sm:$0xff]
    %v93 = vld [vmem:[#allocation9 + $0x68] sm:$0xff]
    %v94 = vld [vmem:[#allocation9 + $0x70] sm:$0xff]
    %v95 = vld [vmem:[#allocation9 + $0x78] sm:$0xff]
    %v96 = vld [vmem:[#allocation2] sm:$0xff]
    %v97 = vld [vmem:[#allocation2 + $0x8] sm:$0xff]
    %v98 = vld [vmem:[#allocation3] sm:$0xff]
    %v99 = vld [vmem:[#allocation3 + $0x8] sm:$0xff]
    %100 = vmatprep.subr.mxu0 0.0
    %101 = vmatpush1.msra.mxu0 %v95
    %102 = vmatprep.subr.mxu0 0.0
    %103 = vmatpush1.msra.mxu0 %v94
    %104 = vmatprep.subr.mxu0 0.0
    %105 = vmatpush1.msra.mxu0 %v93
    %106 = vmatprep.subr.mxu0 0.0
    %107 = vmatpush1.msra.mxu0 %v92
    %108 = vmatprep.subr.mxu0 0.0
    %109 = vmatpush1.msra.mxu0 %v91
    %110 = vmatprep.subr.mxu0 0.0
    %111 = vmatpush1.msra.mxu0 %v90
    %112 = vmatprep.subr.mxu0 0.0
    %113 = vmatpush1.msra.mxu0 %v89
    %114 = vmatprep.subr.mxu0 0.0
    %115 = vmatpush1.msra.mxu0 %v88
    %116 = vmatprep.subr.mxu0 0.0
    %117 = vmatpush1.msra.mxu0 %v87
    %118 = vmatprep.subr.mxu0 0.0
    %119 = vmatpush1.msra.mxu0 %v86
    %120 = vmatprep.subr.mxu0 0.0
    %121 = vmatpush1.msra.mxu0 %v85
    %122 = vmatprep.subr.mxu0 0.0
    %123 = vmatpush1.msra.mxu0 %v84
    %124 = vmatprep.subr.mxu0 0.0
    %125 = vmatpush1.msra.mxu0 %v83
    %126 = vmatprep.subr.mxu0 0.0
    %127 = vmatpush1.msra.mxu0 %v82
    %128 = vmatprep.subr.mxu0 0.0
    %129 = vmatpush1.msra.mxu0 %v81
    %130 = vmatprep.subr.mxu0 0.0
    %131 = vmatpush1.msra.mxu0 %v80
    %132 = vmatprep.subr.mxu0 0.0
    %133 = vmatpush2.msra.mxu0 0.0
    %134 = vmatprep.subr.mxu0 0.0
    %135 = vmatpush2.msra.mxu0 0.0
    %136 = vmatprep.subr.mxu0 0.0
    %137 = vmatpush2.msra.mxu0 0.0
    %138 = vmatprep.subr.mxu0 0.0
    %139 = vmatpush2.msra.mxu0 0.0
    %140 = vmatprep.subr.mxu0 0.0
    %141 = vmatpush2.msra.mxu0 0.0
    %142 = vmatprep.subr.mxu0 0.0
    %143 = vmatpush2.msra.mxu0 0.0
    %144 = vmatprep.subr.mxu0 0.0
    %145 = vmatpush2.msra.mxu0 0.0
    %146 = vmatprep.subr.mxu0 0.0
    %147 = vmatpush2.msra.mxu0 0.0
    %148 = vmatprep.subr.mxu0 0.0
    %149 = vmatpush2.msra.mxu0 0.0
    %150 = vmatprep.subr.mxu0 0.0
    %151 = vmatpush2.msra.mxu0 0.0
    %152 = vmatprep.subr.mxu0 0.0
    %153 = vmatpush2.msra.mxu0 0.0
    %154 = vmatprep.subr.mxu0 0.0
    %155 = vmatpush2.msra.mxu0 0.0
    %156 = vmatprep.subr.mxu0 0.0
    %157 = vmatpush2.msra.mxu0 0.0
    %158 = vmatprep.subr.mxu0 0.0
    %159 = vmatpush2.msra.mxu0 0.0
    %160 = vmatprep.subr.mxu0 0.0
    %161 = vmatpush2.msra.mxu0 0.0
    %162 = vmatprep.subr.mxu0 0.0
    %163 = vmatpush2.msra.mxu0 0.0
    %164 = vmatprep.mubr.f32.mxu0 0.0
    %165 = vmatmul.mubr.f32.gmra.mxu0 %v98
    %v166 = vpop.f32.mrf.mxu0
    %v167 = vadd.f32 0.0, %v166
    %v168 = vpop.f32.mrf.mxu0
    %169 = vmatprep.mubr.f32.mxu0 0.0
    %170 = vmatmul.mubr.f32.gmra.mxu0 %v99
    %v171 = vpop.f32.mrf.mxu0
    %v172 = vadd.f32 0.0, %v171
    %v173 = vpop.f32.mrf.mxu0
    %174 = vdwg.mxu0
    %175 = vmatprep.subr.mxu0 0.0
    %176 = vmatpush1.msra.mxu0 %v79
    %177 = vmatprep.subr.mxu0 0.0
    %178 = vmatpush1.msra.mxu0 %v78
    %179 = vmatprep.subr.mxu0 0.0
    %180 = vmatpush1.msra.mxu0 %v77
    %181 = vmatprep.subr.mxu0 0.0
    %182 = vmatpush1.msra.mxu0 %v76
    %183 = vmatprep.subr.mxu0 0.0
    %184 = vmatpush1.msra.mxu0 %v75
    %185 = vmatprep.subr.mxu0 0.0
    %186 = vmatpush1.msra.mxu0 %v74
    %187 = vmatprep.subr.mxu0 0.0
    %188 = vmatpush1.msra.mxu0 %v73
    %189 = vmatprep.subr.mxu0 0.0
    %190 = vmatpush1.msra.mxu0 %v72
    %191 = vmatprep.subr.mxu0 0.0
    %192 = vmatpush1.msra.mxu0 %v71
    %193 = vmatprep.subr.mxu0 0.0
    %194 = vmatpush1.msra.mxu0 %v70
    %195 = vmatprep.subr.mxu0 0.0
    %196 = vmatpush1.msra.mxu0 %v69
    %197 = vmatprep.subr.mxu0 0.0
    %198 = vmatpush1.msra.mxu0 %v68
    %199 = vmatprep.subr.mxu0 0.0
    %200 = vmatpush1.msra.mxu0 %v67
    %201 = vmatprep.subr.mxu0 0.0
    %202 = vmatpush1.msra.mxu0 %v66
    %203 = vmatprep.subr.mxu0 0.0
    %204 = vmatpush1.msra.mxu0 %v65
    %205 = vmatprep.subr.mxu0 0.0
    %206 = vmatpush1.msra.mxu0 %v64
    %207 = vmatprep.subr.mxu0 0.0
    %208 = vmatpush2.msra.mxu0 0.0
    %209 = vmatprep.subr.mxu0 0.0
    %210 = vmatpush2.msra.mxu0 0.0
    %211 = vmatprep.subr.mxu0 0.0
    %212 = vmatpush2.msra.mxu0 0.0
    %213 = vmatprep.subr.mxu0 0.0
    %214 = vmatpush2.msra.mxu0 0.0
    %215 = vmatprep.subr.mxu0 0.0
    %216 = vmatpush2.msra.mxu0 0.0
    %217 = vmatprep.subr.mxu0 0.0
    %218 = vmatpush2.msra.mxu0 0.0
    %219 = vmatprep.subr.mxu0 0.0
    %220 = vmatpush2.msra.mxu0 0.0
    %221 = vmatprep.subr.mxu0 0.0
    %222 = vmatpush2.msra.mxu0 0.0
    %223 = vmatprep.subr.mxu0 0.0
    %224 = vmatpush2.msra.mxu0 0.0
    %225 = vmatprep.subr.mxu0 0.0
    %226 = vmatpush2.msra.mxu0 0.0
    %227 = vmatprep.subr.mxu0 0.0
    %228 = vmatpush2.msra.mxu0 0.0
    %229 = vmatprep.subr.mxu0 0.0
    %230 = vmatpush2.msra.mxu0 0.0
    %231 = vmatprep.subr.mxu0 0.0
    %232 = vmatpush2.msra.mxu0 0.0
    %233 = vmatprep.subr.mxu0 0.0
    %234 = vmatpush2.msra.mxu0 0.0
    %235 = vmatprep.subr.mxu0 0.0
    %236 = vmatpush2.msra.mxu0 0.0
    %237 = vmatprep.subr.mxu0 0.0
    %238 = vmatpush2.msra.mxu0 0.0
    %239 = vmatprep.mubr.f32.mxu0 0.0
    %240 = vmatmul.mubr.f32.gmra.mxu0 %v96
    %v241 = vpop.f32.mrf.mxu0
    %v242 = vadd.f32 %v167, %v241
    %v243 = vpop.f32.mrf.mxu0
    %244 = vmatprep.mubr.f32.mxu0 0.0
    %245 = vmatmul.mubr.f32.gmra.mxu0 %v97
    %v246 = vpop.f32.mrf.mxu0
    %v247 = vadd.f32 %v172, %v246
    %v248 = vpop.f32.mrf.mxu0
    %249 = vdwg.mxu0
    %v250 = vld [vmem:[#allocation4] sm:$0xff]
    %v251 = vld [vmem:[#allocation4 + $0x8] sm:$0xff]
    %v252 = vadd.f32 %v242, %v250
    %v253 = vadd.f32 %v247, %v251
    %v254 = vtanh.pop %v252
    %v255 = vtanh.pop %v253
    %v256 = vsub.f32 %v254, %v98
    %v257 = vsub.f32 %v255, %v99
    %v258 = vsub.f32 %v256, %v96
    %v259 = vsub.f32 %v257, %v97
    %v260 = vmul.f32 %v258, 0.05
    %v261 = vmul.f32 %v259, 0.05
    %v262 = vadd.f32 %v96, %v260
    %v263 = vadd.f32 %v97, %v261
    %v264 = vmul.f32 %v262, 0.05
    %v265 = vmul.f32 %v263, 0.05
    %v266 = vadd.f32 %v98, %v264
    %v267 = vadd.f32 %v99, %v265
    %268 = vmatprep.subr.mxu0 0.0
    %269 = vmatpush1.msra.mxu0 %v95
    %270 = vmatprep.subr.mxu0 0.0
    %271 = vmatpush1.msra.mxu0 %v94
    %272 = vmatprep.subr.mxu0 0.0
    %273 = vmatpush1.msra.mxu0 %v93
    %274 = vmatprep.subr.mxu0 0.0
    %275 = vmatpush1.msra.mxu0 %v92
    %276 = vmatprep.subr.mxu0 0.0
    %277 = vmatpush1.msra.mxu0 %v91
    %278 = vmatprep.subr.mxu0 0.0
    %279 = vmatpush1.msra.mxu0 %v90
    %280 = vmatprep.subr.mxu0 0.0
    %281 = vmatpush1.msra.mxu0 %v89
    %282 = vmatprep.subr.mxu0 0.0
    %283 = vmatpush1.msra.mxu0 %v88
    %284 = vmatprep.subr.mxu0 0.0
    %285 = vmatpush1.msra.mxu0 %v87
    %286 = vmatprep.subr.mxu0 0.0
    %287 = vmatpush1.msra.mxu0 %v86
    %288 = vmatprep.subr.mxu0 0.0
    %289 = vmatpush1.msra.mxu0 %v85
    %290 = vmatprep.subr.mxu0 0.0
    %291 = vmatpush1.msra.mxu0 %v84
    %292 = vmatprep.subr.mxu0 0.0
    %293 = vmatpush1.msra.mxu0 %v83
    %294 = vmatprep.subr.mxu0 0.0
    %295 = vmatpush1.msra.mxu0 %v82
    %296 = vmatprep.subr.mxu0 0.0
    %297 = vmatpush1.msra.mxu0 %v81
    %298 = vmatprep.subr.mxu0 0.0
    %299 = vmatpush1.msra.mxu0 %v80
    %300 = vmatprep.subr.mxu0 0.0
    %301 = vmatpush2.msra.mxu0 0.0
    %302 = vmatprep.subr.mxu0 0.0
    %303 = vmatpush2.msra.mxu0 0.0
    %304 = vmatprep.subr.mxu0 0.0
    %305 = vmatpush2.msra.mxu0 0.0
    %306 = vmatprep.subr.mxu0 0.0
    %307 = vmatpush2.msra.mxu0 0.0
    %308 = vmatprep.subr.mxu0 0.0
    %309 = vmatpush2.msra.mxu0 0.0
    %310 = vmatprep.subr.mxu0 0.0
    %311 = vmatpush2.msra.mxu0 0.0
    %312 = vmatprep.subr.mxu0 0.0
    %313 = vmatpush2.msra.mxu0 0.0
    %314 = vmatprep.subr.mxu0 0.0
    %315 = vmatpush2.msra.mxu0 0.0
    %316 = vmatprep.subr.mxu0 0.0
    %317 = vmatpush2.msra.mxu0 0.0
    %318 = vmatprep.subr.mxu0 0.0
    %319 = vmatpush2.msra.mxu0 0.0
    %320 = vmatprep.subr.mxu0 0.0
    %321 = vmatpush2.msra.mxu0 0.0
    %322 = vmatprep.subr.mxu0 0.0
    %323 = vmatpush2.msra.mxu0 0.0
    %324 = vmatprep.subr.mxu0 0.0
    %325 = vmatpush2.msra.mxu0 0.0
    %326 = vmatprep.subr.mxu0 0.0
    %327 = vmatpush2.msra.mxu0 0.0
    %328 = vmatprep.subr.mxu0 0.0
    %329 = vmatpush2.msra.mxu0 0.0
    %330 = vmatprep.subr.mxu0 0.0
    %331 = vmatpush2.msra.mxu0 0.0
    %332 = vmatprep.mubr.f32.mxu0 0.0
    %333 = vmatmul.mubr.f32.gmra.mxu0 %v266
    %v334 = vpop.f32.mrf.mxu0
    %v335 = vadd.f32 0.0, %v334
    %v336 = vpop.f32.mrf.mxu0
    %337 = vmatprep.mubr.f32.mxu0 0.0
    %338 = vmatmul.mubr.f32.gmra.mxu0 %v267
    %v339 = vpop.f32.mrf.mxu0
    %v340 = vadd.f32 0.0, %v339
    %v341 = vpop.f32.mrf.mxu0
    %342 = vdwg.mxu0
    %343 = vmatprep.subr.mxu0 0.0
    %344 = vmatpush1.msra.mxu0 %v79
    %345 = vmatprep.subr.mxu0 0.0
    %346 = vmatpush1.msra.mxu0 %v78
    %347 = vmatprep.subr.mxu0 0.0
    %348 = vmatpush1.msra.mxu0 %v77
    %349 = vmatprep.subr.mxu0 0.0
    %350 = vmatpush1.msra.mxu0 %v76
    %351 = vmatprep.subr.mxu0 0.0
    %352 = vmatpush1.msra.mxu0 %v75
    %353 = vmatprep.subr.mxu0 0.0
    %354 = vmatpush1.msra.mxu0 %v74
    %355 = vmatprep.subr.mxu0 0.0
    %356 = vmatpush1.msra.mxu0 %v73
    %357 = vmatprep.subr.mxu0 0.0
    %358 = vmatpush1.msra.mxu0 %v72
    %359 = vmatprep.subr.mxu0 0.0
    %360 = vmatpush1.msra.mxu0 %v71
    %361 = vmatprep.subr.mxu0 0.0
    %362 = vmatpush1.msra.mxu0 %v70
    %363 = vmatprep.subr.mxu0 0.0
    %364 = vmatpush1.msra.mxu0 %v69
    %365 = vmatprep.subr.mxu0 0.0
    %366 = vmatpush1.msra.mxu0 %v68
    %367 = vmatprep.subr.mxu0 0.0
    %368 = vmatpush1.msra.mxu0 %v67
    %369 = vmatprep.subr.mxu0 0.0
    %370 = vmatpush1.msra.mxu0 %v66
    %371 = vmatprep.subr.mxu0 0.0
    %372 = vmatpush1.msra.mxu0 %v65
    %373 = vmatprep.subr.mxu0 0.0
    %374 = vmatpush1.msra.mxu0 %v64
    %375 = vmatprep.subr.mxu0 0.0
    %376 = vmatpush2.msra.mxu0 0.0
    %377 = vmatprep.subr.mxu0 0.0
    %378 = vmatpush2.msra.mxu0 0.0
    %379 = vmatprep.subr.mxu0 0.0
    %380 = vmatpush2.msra.mxu0 0.0
    %381 = vmatprep.subr.mxu0 0.0
    %382 = vmatpush2.msra.mxu0 0.0
    %383 = vmatprep.subr.mxu0 0.0
    %384 = vmatpush2.msra.mxu0 0.0
    %385 = vmatprep.subr.mxu0 0.0
    %386 = vmatpush2.msra.mxu0 0.0
    %387 = vmatprep.subr.mxu0 0.0
    %388 = vmatpush2.msra.mxu0 0.0
    %389 = vmatprep.subr.mxu0 0.0
    %390 = vmatpush2.msra.mxu0 0.0
    %391 = vmatprep.subr.mxu0 0.0
    %392 = vmatpush2.msra.mxu0 0.0
    %393 = vmatprep.subr.mxu0 0.0
    %394 = vmatpush2.msra.mxu0 0.0
    %395 = vmatprep.subr.mxu0 0.0
    %396 = vmatpush2.msra.mxu0 0.0
    %397 = vmatprep.subr.mxu0 0.0
    %398 = vmatpush2.msra.mxu0 0.0
    %399 = vmatprep.subr.mxu0 0.0
    %400 = vmatpush2.msra.mxu0 0.0
    %401 = vmatprep.subr.mxu0 0.0
    %402 = vmatpush2.msra.mxu0 0.0
    %403 = vmatprep.subr.mxu0 0.0
    %404 = vmatpush2.msra.mxu0 0.0
    %405 = vmatprep.subr.mxu0 0.0
    %406 = vmatpush2.msra.mxu0 0.0
    %407 = vmatprep.mubr.f32.mxu0 0.0
    %408 = vmatmul.mubr.f32.gmra.mxu0 %v262
    %v409 = vpop.f32.mrf.mxu0
    %v410 = vadd.f32 %v335, %v409
    %v411 = vpop.f32.mrf.mxu0
    %412 = vmatprep.mubr.f32.mxu0 0.0
    %413 = vmatmul.mubr.f32.gmra.mxu0 %v263
    %v414 = vpop.f32.mrf.mxu0
    %v415 = vadd.f32 %v340, %v414
    %v416 = vpop.f32.mrf.mxu0
    %417 = vdwg.mxu0
    %s418 = scalar_lea.vmem [#allocation4], 16
    %v419 = vld [vmem:[%s418] sm:$0xff]
    %v420 = vld [vmem:[%s418 + $0x8] sm:$0xff]
    %v421 = vadd.f32 %v410, %v419
    %v422 = vadd.f32 %v415, %v420
    %v423 = vtanh.pop %v421
    %v424 = vtanh.pop %v422
    %v425 = vsub.f32 %v423, %v266
    %v426 = vsub.f32 %v424, %v267
    %v427 = vsub.f32 %v425, %v262
    %v428 = vsub.f32 %v426, %v263
    %v429 = vmul.f32 %v427, 0.05
    %v430 = vmul.f32 %v428, 0.05
    %v431 = vadd.f32 %v262, %v429
    %v432 = vadd.f32 %v263, %v430
    %v433 = vmul.f32 %v431, 0.05
    %v434 = vmul.f32 %v432, 0.05
    %v435 = vadd.f32 %v266, %v433
    %v436 = vadd.f32 %v267, %v434
    %437 = vmatprep.subr.mxu0 0.0
    %438 = vmatpush1.msra.mxu0 %v95
    %439 = vmatprep.subr.mxu0 0.0
    %440 = vmatpush1.msra.mxu0 %v94
    %441 = vmatprep.subr.mxu0 0.0
    %442 = vmatpush1.msra.mxu0 %v93
    %443 = vmatprep.subr.mxu0 0.0
    %444 = vmatpush1.msra.mxu0 %v92
    %445 = vmatprep.subr.mxu0 0.0
    %446 = vmatpush1.msra.mxu0 %v91
    %447 = vmatprep.subr.mxu0 0.0
    %448 = vmatpush1.msra.mxu0 %v90
    %449 = vmatprep.subr.mxu0 0.0
    %450 = vmatpush1.msra.mxu0 %v89
    %451 = vmatprep.subr.mxu0 0.0
    %452 = vmatpush1.msra.mxu0 %v88
    %453 = vmatprep.subr.mxu0 0.0
    %454 = vmatpush1.msra.mxu0 %v87
    %455 = vmatprep.subr.mxu0 0.0
    %456 = vmatpush1.msra.mxu0 %v86
    %457 = vmatprep.subr.mxu0 0.0
    %458 = vmatpush1.msra.mxu0 %v85
    %459 = vmatprep.subr.mxu0 0.0
    %460 = vmatpush1.msra.mxu0 %v84
    %461 = vmatprep.subr.mxu0 0.0
    %462 = vmatpush1.msra.mxu0 %v83
    %463 = vmatprep.subr.mxu0 0.0
    %464 = vmatpush1.msra.mxu0 %v82
    %465 = vmatprep.subr.mxu0 0.0
    %466 = vmatpush1.msra.mxu0 %v81
    %467 = vmatprep.subr.mxu0 0.0
    %468 = vmatpush1.msra.mxu0 %v80
    %469 = vmatprep.subr.mxu0 0.0
    %470 = vmatpush2.msra.mxu0 0.0
    %471 = vmatprep.subr.mxu0 0.0
    %472 = vmatpush2.msra.mxu0 0.0
    %473 = vmatprep.subr.mxu0 0.0
    %474 = vmatpush2.msra.mxu0 0.0
    %475 = vmatprep.subr.mxu0 0.0
    %476 = vmatpush2.msra.mxu0 0.0
    %477 = vmatprep.subr.mxu0 0.0
    %478 = vmatpush2.msra.mxu0 0.0
    %479 = vmatprep.subr.mxu0 0.0
    %480 = vmatpush2.msra.mxu0 0.0
    %481 = vmatprep.subr.mxu0 0.0
    %482 = vmatpush2.msra.mxu0 0.0
    %483 = vmatprep.subr.mxu0 0.0
    %484 = vmatpush2.msra.mxu0 0.0
    %485 = vmatprep.subr.mxu0 0.0
    %486 = vmatpush2.msra.mxu0 0.0
    %487 = vmatprep.subr.mxu0 0.0
    %488 = vmatpush2.msra.mxu0 0.0
    %489 = vmatprep.subr.mxu0 0.0
    %490 = vmatpush2.msra.mxu0 0.0
    %491 = vmatprep.subr.mxu0 0.0
    %492 = vmatpush2.msra.mxu0 0.0
    %493 = vmatprep.subr.mxu0 0.0
    %494 = vmatpush2.msra.mxu0 0.0
    %495 = vmatprep.subr.mxu0 0.0
    %496 = vmatpush2.msra.mxu0 0.0
    %497 = vmatprep.subr.mxu0 0.0
    %498 = vmatpush2.msra.mxu0 0.0
    %499 = vmatprep.subr.mxu0 0.0
    %500 = vmatpush2.msra.mxu0 0.0
    %501 = vmatprep.mubr.f32.mxu0 0.0
    %502 = vmatmul.mubr.f32.gmra.mxu0 %v435
    %v503 = vpop.f32.mrf.mxu0
    %v504 = vadd.f32 0.0, %v503
    %v505 = vpop.f32.mrf.mxu0
    %506 = vmatprep.mubr.f32.mxu0 0.0
    %507 = vmatmul.mubr.f32.gmra.mxu0 %v436
    %v508 = vpop.f32.mrf.mxu0
    %v509 = vadd.f32 0.0, %v508
    %v510 = vpop.f32.mrf.mxu0
    %511 = vdwg.mxu0
    %512 = vmatprep.subr.mxu0 0.0
    %513 = vmatpush1.msra.mxu0 %v79
    %514 = vmatprep.subr.mxu0 0.0
    %515 = vmatpush1.msra.mxu0 %v78
    %516 = vmatprep.subr.mxu0 0.0
    %517 = vmatpush1.msra.mxu0 %v77
    %518 = vmatprep.subr.mxu0 0.0
    %519 = vmatpush1.msra.mxu0 %v76
    %520 = vmatprep.subr.mxu0 0.0
    %521 = vmatpush1.msra.mxu0 %v75
    %522 = vmatprep.subr.mxu0 0.0
    %523 = vmatpush1.msra.mxu0 %v74
    %524 = vmatprep.subr.mxu0 0.0
    %525 = vmatpush1.msra.mxu0 %v73
    %526 = vmatprep.subr.mxu0 0.0
    %527 = vmatpush1.msra.mxu0 %v72
    %528 = vmatprep.subr.mxu0 0.0
    %529 = vmatpush1.msra.mxu0 %v71
    %530 = vmatprep.subr.mxu0 0.0
    %531 = vmatpush1.msra.mxu0 %v70
    %532 = vmatprep.subr.mxu0 0.0
    %533 = vmatpush1.msra.mxu0 %v69
    %534 = vmatprep.subr.mxu0 0.0
    %535 = vmatpush1.msra.mxu0 %v68
    %536 = vmatprep.subr.mxu0 0.0
    %537 = vmatpush1.msra.mxu0 %v67
    %538 = vmatprep.subr.mxu0 0.0
    %539 = vmatpush1.msra.mxu0 %v66
    %540 = vmatprep.subr.mxu0 0.0
    %541 = vmatpush1.msra.mxu0 %v65
    %542 = vmatprep.subr.mxu0 0.0
    %543 = vmatpush1.msra.mxu0 %v64
    %544 = vmatprep.subr.mxu0 0.0
    %545 = vmatpush2.msra.mxu0 0.0
    %546 = vmatprep.subr.mxu0 0.0
    %547 = vmatpush2.msra.mxu0 0.0
    %548 = vmatprep.subr.mxu0 0.0
    %549 = vmatpush2.msra.mxu0 0.0
    %550 = vmatprep.subr.mxu0 0.0
    %551 = vmatpush2.msra.mxu0 0.0
    %552 = vmatprep.subr.mxu0 0.0
    %553 = vmatpush2.msra.mxu0 0.0
    %554 = vmatprep.subr.mxu0 0.0
    %555 = vmatpush2.msra.mxu0 0.0
    %556 = vmatprep.subr.mxu0 0.0
    %557 = vmatpush2.msra.mxu0 0.0
    %558 = vmatprep.subr.mxu0 0.0
    %559 = vmatpush2.msra.mxu0 0.0
    %560 = vmatprep.subr.mxu0 0.0
    %561 = vmatpush2.msra.mxu0 0.0
    %562 = vmatprep.subr.mxu0 0.0
    %563 = vmatpush2.msra.mxu0 0.0
    %564 = vmatprep.subr.mxu0 0.0
    %565 = vmatpush2.msra.mxu0 0.0
    %566 = vmatprep.subr.mxu0 0.0
    %567 = vmatpush2.msra.mxu0 0.0
    %568 = vmatprep.subr.mxu0 0.0
    %569 = vmatpush2.msra.mxu0 0.0
    %570 = vmatprep.subr.mxu0 0.0
    %571 = vmatpush2.msra.mxu0 0.0
    %572 = vmatprep.subr.mxu0 0.0
    %573 = vmatpush2.msra.mxu0 0.0
    %574 = vmatprep.subr.mxu0 0.0
    %575 = vmatpush2.msra.mxu0 0.0
    %576 = vmatprep.mubr.f32.mxu0 0.0
    %577 = vmatmul.mubr.f32.gmra.mxu0 %v431
    %v578 = vpop.f32.mrf.mxu0
    %v579 = vadd.f32 %v504, %v578
    %v580 = vpop.f32.mrf.mxu0
    %581 = vmatprep.mubr.f32.mxu0 0.0
    %582 = vmatmul.mubr.f32.gmra.mxu0 %v432
    %v583 = vpop.f32.mrf.mxu0
    %v584 = vadd.f32 %v509, %v583
    %v585 = vpop.f32.mrf.mxu0
    %586 = vdwg.mxu0
    %s587 = scalar_lea.vmem [#allocation4], 32
    %v588 = vld [vmem:[%s587] sm:$0xff]
    %v589 = vld [vmem:[%s587 + $0x8] sm:$0xff]
    %v590 = vadd.f32 %v579, %v588
    %v591 = vadd.f32 %v584, %v589
    %v592 = vtanh.pop %v590
    %v593 = vtanh.pop %v591
    %v594 = vsub.f32 %v592, %v435
    %v595 = vsub.f32 %v593, %v436
    %v596 = vsub.f32 %v594, %v431
    %v597 = vsub.f32 %v595, %v432
    %v598 = vmul.f32 %v596, 0.05
    %v599 = vmul.f32 %v597, 0.05
    %v600 = vadd.f32 %v431, %v598
    %v601 = vadd.f32 %v432, %v599
    %v602 = vmul.f32 %v600, 0.05
    %v603 = vmul.f32 %v601, 0.05
    %v604 = vadd.f32 %v435, %v602
    %v605 = vadd.f32 %v436, %v603
    %606 = vmatprep.subr.mxu0 0.0
    %607 = vmatpush1.msra.mxu0 %v95
    %608 = vmatprep.subr.mxu0 0.0
    %609 = vmatpush1.msra.mxu0 %v94
    %610 = vmatprep.subr.mxu0 0.0
    %611 = vmatpush1.msra.mxu0 %v93
    %612 = vmatprep.subr.mxu0 0.0
    %613 = vmatpush1.msra.mxu0 %v92
    %614 = vmatprep.subr.mxu0 0.0
    %615 = vmatpush1.msra.mxu0 %v91
    %616 = vmatprep.subr.mxu0 0.0
    %617 = vmatpush1.msra.mxu0 %v90
    %618 = vmatprep.subr.mxu0 0.0
    %619 = vmatpush1.msra.mxu0 %v89
    %620 = vmatprep.subr.mxu0 0.0
    %621 = vmatpush1.msra.mxu0 %v88
    %622 = vmatprep.subr.mxu0 0.0
    %623 = vmatpush1.msra.mxu0 %v87
    %624 = vmatprep.subr.mxu0 0.0
    %625 = vmatpush1.msra.mxu0 %v86
    %626 = vmatprep.subr.mxu0 0.0
    %627 = vmatpush1.msra.mxu0 %v85
    %628 = vmatprep.subr.mxu0 0.0
    %629 = vmatpush1.msra.mxu0 %v84
    %630 = vmatprep.subr.mxu0 0.0
    %631 = vmatpush1.msra.mxu0 %v83
    %632 = vmatprep.subr.mxu0 0.0
    %633 = vmatpush1.msra.mxu0 %v82
    %634 = vmatprep.subr.mxu0 0.0
    %635 = vmatpush1.msra.mxu0 %v81
    %636 = vmatprep.subr.mxu0 0.0
    %637 = vmatpush1.msra.mxu0 %v80
    %638 = vmatprep.subr.mxu0 0.0
    %639 = vmatpush2.msra.mxu0 0.0
    %640 = vmatprep.subr.mxu0 0.0
    %641 = vmatpush2.msra.mxu0 0.0
    %642 = vmatprep.subr.mxu0 0.0
    %643 = vmatpush2.msra.mxu0 0.0
    %644 = vmatprep.subr.mxu0 0.0
    %645 = vmatpush2.msra.mxu0 0.0
    %646 = vmatprep.subr.mxu0 0.0
    %647 = vmatpush2.msra.mxu0 0.0
    %648 = vmatprep.subr.mxu0 0.0
    %649 = vmatpush2.msra.mxu0 0.0
    %650 = vmatprep.subr.mxu0 0.0
    %651 = vmatpush2.msra.mxu0 0.0
    %652 = vmatprep.subr.mxu0 0.0
    %653 = vmatpush2.msra.mxu0 0.0
    %654 = vmatprep.subr.mxu0 0.0
    %655 = vmatpush2.msra.mxu0 0.0
    %656 = vmatprep.subr.mxu0 0.0
    %657 = vmatpush2.msra.mxu0 0.0
    %658 = vmatprep.subr.mxu0 0.0
    %659 = vmatpush2.msra.mxu0 0.0
    %660 = vmatprep.subr.mxu0 0.0
    %661 = vmatpush2.msra.mxu0 0.0
    %662 = vmatprep.subr.mxu0 0.0
    %663 = vmatpush2.msra.mxu0 0.0
    %664 = vmatprep.subr.mxu0 0.0
    %665 = vmatpush2.msra.mxu0 0.0
    %666 = vmatprep.subr.mxu0 0.0
    %667 = vmatpush2.msra.mxu0 0.0
    %668 = vmatprep.subr.mxu0 0.0
    %669 = vmatpush2.msra.mxu0 0.0
    %670 = vmatprep.mubr.f32.mxu0 0.0
    %671 = vmatmul.mubr.f32.gmra.mxu0 %v604
    %v672 = vpop.f32.mrf.mxu0
    %v673 = vadd.f32 0.0, %v672
    %v674 = vpop.f32.mrf.mxu0
    %675 = vmatprep.mubr.f32.mxu0 0.0
    %676 = vmatmul.mubr.f32.gmra.mxu0 %v605
    %v677 = vpop.f32.mrf.mxu0
    %v678 = vadd.f32 0.0, %v677
    %v679 = vpop.f32.mrf.mxu0
    %680 = vdwg.mxu0
    %681 = vmatprep.subr.mxu0 0.0
    %682 = vmatpush1.msra.mxu0 %v79
    %683 = vmatprep.subr.mxu0 0.0
    %684 = vmatpush1.msra.mxu0 %v78
    %685 = vmatprep.subr.mxu0 0.0
    %686 = vmatpush1.msra.mxu0 %v77
    %687 = vmatprep.subr.mxu0 0.0
    %688 = vmatpush1.msra.mxu0 %v76
    %689 = vmatprep.subr.mxu0 0.0
    %690 = vmatpush1.msra.mxu0 %v75
    %691 = vmatprep.subr.mxu0 0.0
    %692 = vmatpush1.msra.mxu0 %v74
    %693 = vmatprep.subr.mxu0 0.0
    %694 = vmatpush1.msra.mxu0 %v73
    %695 = vmatprep.subr.mxu0 0.0
    %696 = vmatpush1.msra.mxu0 %v72
    %697 = vmatprep.subr.mxu0 0.0
    %698 = vmatpush1.msra.mxu0 %v71
    %699 = vmatprep.subr.mxu0 0.0
    %700 = vmatpush1.msra.mxu0 %v70
    %701 = vmatprep.subr.mxu0 0.0
    %702 = vmatpush1.msra.mxu0 %v69
    %703 = vmatprep.subr.mxu0 0.0
    %704 = vmatpush1.msra.mxu0 %v68
    %705 = vmatprep.subr.mxu0 0.0
    %706 = vmatpush1.msra.mxu0 %v67
    %707 = vmatprep.subr.mxu0 0.0
    %708 = vmatpush1.msra.mxu0 %v66
    %709 = vmatprep.subr.mxu0 0.0
    %710 = vmatpush1.msra.mxu0 %v65
    %711 = vmatprep.subr.mxu0 0.0
    %712 = vmatpush1.msra.mxu0 %v64
    %713 = vmatprep.subr.mxu0 0.0
    %714 = vmatpush2.msra.mxu0 0.0
    %715 = vmatprep.subr.mxu0 0.0
    %716 = vmatpush2.msra.mxu0 0.0
    %717 = vmatprep.subr.mxu0 0.0
    %718 = vmatpush2.msra.mxu0 0.0
    %719 = vmatprep.subr.mxu0 0.0
    %720 = vmatpush2.msra.mxu0 0.0
    %721 = vmatprep.subr.mxu0 0.0
    %722 = vmatpush2.msra.mxu0 0.0
    %723 = vmatprep.subr.mxu0 0.0
    %724 = vmatpush2.msra.mxu0 0.0
    %725 = vmatprep.subr.mxu0 0.0
    %726 = vmatpush2.msra.mxu0 0.0
    %727 = vmatprep.subr.mxu0 0.0
    %728 = vmatpush2.msra.mxu0 0.0
    %729 = vmatprep.subr.mxu0 0.0
    %730 = vmatpush2.msra.mxu0 0.0
    %731 = vmatprep.subr.mxu0 0.0
    %732 = vmatpush2.msra.mxu0 0.0
    %733 = vmatprep.subr.mxu0 0.0
    %734 = vmatpush2.msra.mxu0 0.0
    %735 = vmatprep.subr.mxu0 0.0
    %736 = vmatpush2.msra.mxu0 0.0
    %737 = vmatprep.subr.mxu0 0.0
    %738 = vmatpush2.msra.mxu0 0.0
    %739 = vmatprep.subr.mxu0 0.0
    %740 = vmatpush2.msra.mxu0 0.0
    %741 = vmatprep.subr.mxu0 0.0
    %742 = vmatpush2.msra.mxu0 0.0
    %743 = vmatprep.subr.mxu0 0.0
    %744 = vmatpush2.msra.mxu0 0.0
    %745 = vmatprep.mubr.f32.mxu0 0.0
    %746 = vmatmul.mubr.f32.gmra.mxu0 %v600
    %v747 = vpop.f32.mrf.mxu0
    %v748 = vadd.f32 %v673, %v747
    %v749 = vpop.f32.mrf.mxu0
    %750 = vmatprep.mubr.f32.mxu0 0.0
    %751 = vmatmul.mubr.f32.gmra.mxu0 %v601
    %v752 = vpop.f32.mrf.mxu0
    %v753 = vadd.f32 %v678, %v752
    %v754 = vpop.f32.mrf.mxu0
    %755 = vdwg.mxu0
    %s756 = scalar_lea.vmem [#allocation4], 48
    %v757 = vld [vmem:[%s756] sm:$0xff]
    %v758 = vld [vmem:[%s756 + $0x8] sm:$0xff]
    %v759 = vadd.f32 %v748, %v757
    %v760 = vadd.f32 %v753, %v758
    %v761 = vtanh.pop %v759
    %v762 = vtanh.pop %v760
    %v763 = vsub.f32 %v761, %v604
    %v764 = vsub.f32 %v762, %v605
    %v765 = vsub.f32 %v763, %v600
    %v766 = vsub.f32 %v764, %v601
    %v767 = vmul.f32 %v765, 0.05
    %v768 = vmul.f32 %v766, 0.05
    %v769 = vadd.f32 %v600, %v767
    %v770 = vadd.f32 %v601, %v768
    %v771 = vmul.f32 %v769, 0.05
    %v772 = vmul.f32 %v770, 0.05
    %v773 = vadd.f32 %v604, %v771
    %v774 = vadd.f32 %v605, %v772
    %775 = vmatprep.subr.mxu0 0.0
    %776 = vmatpush1.msra.mxu0 %v95
    %777 = vmatprep.subr.mxu0 0.0
    %778 = vmatpush1.msra.mxu0 %v94
    %779 = vmatprep.subr.mxu0 0.0
    %780 = vmatpush1.msra.mxu0 %v93
    %781 = vmatprep.subr.mxu0 0.0
    %782 = vmatpush1.msra.mxu0 %v92
    %783 = vmatprep.subr.mxu0 0.0
    %784 = vmatpush1.msra.mxu0 %v91
    %785 = vmatprep.subr.mxu0 0.0
    %786 = vmatpush1.msra.mxu0 %v90
    %787 = vmatprep.subr.mxu0 0.0
    %788 = vmatpush1.msra.mxu0 %v89
    %789 = vmatprep.subr.mxu0 0.0
    %790 = vmatpush1.msra.mxu0 %v88
    %791 = vmatprep.subr.mxu0 0.0
    %792 = vmatpush1.msra.mxu0 %v87
    %793 = vmatprep.subr.mxu0 0.0
    %794 = vmatpush1.msra.mxu0 %v86
    %795 = vmatprep.subr.mxu0 0.0
    %796 = vmatpush1.msra.mxu0 %v85
    %797 = vmatprep.subr.mxu0 0.0
    %798 = vmatpush1.msra.mxu0 %v84
    %799 = vmatprep.subr.mxu0 0.0
    %800 = vmatpush1.msra.mxu0 %v83
    %801 = vmatprep.subr.mxu0 0.0
    %802 = vmatpush1.msra.mxu0 %v82
    %803 = vmatprep.subr.mxu0 0.0
    %804 = vmatpush1.msra.mxu0 %v81
    %805 = vmatprep.subr.mxu0 0.0
    %806 = vmatpush1.msra.mxu0 %v80
    %807 = vmatprep.subr.mxu0 0.0
    %808 = vmatpush2.msra.mxu0 0.0
    %809 = vmatprep.subr.mxu0 0.0
    %810 = vmatpush2.msra.mxu0 0.0
    %811 = vmatprep.subr.mxu0 0.0
    %812 = vmatpush2.msra.mxu0 0.0
    %813 = vmatprep.subr.mxu0 0.0
    %814 = vmatpush2.msra.mxu0 0.0
    %815 = vmatprep.subr.mxu0 0.0
    %816 = vmatpush2.msra.mxu0 0.0
    %817 = vmatprep.subr.mxu0 0.0
    %818 = vmatpush2.msra.mxu0 0.0
    %819 = vmatprep.subr.mxu0 0.0
    %820 = vmatpush2.msra.mxu0 0.0
    %821 = vmatprep.subr.mxu0 0.0
    %822 = vmatpush2.msra.mxu0 0.0
    %823 = vmatprep.subr.mxu0 0.0
    %824 = vmatpush2.msra.mxu0 0.0
    %825 = vmatprep.subr.mxu0 0.0
    %826 = vmatpush2.msra.mxu0 0.0
    %827 = vmatprep.subr.mxu0 0.0
    %828 = vmatpush2.msra.mxu0 0.0
    %829 = vmatprep.subr.mxu0 0.0
    %830 = vmatpush2.msra.mxu0 0.0
    %831 = vmatprep.subr.mxu0 0.0
    %832 = vmatpush2.msra.mxu0 0.0
    %833 = vmatprep.subr.mxu0 0.0
    %834 = vmatpush2.msra.mxu0 0.0
    %835 = vmatprep.subr.mxu0 0.0
    %836 = vmatpush2.msra.mxu0 0.0
    %837 = vmatprep.subr.mxu0 0.0
    %838 = vmatpush2.msra.mxu0 0.0
    %839 = vmatprep.mubr.f32.mxu0 0.0
    %840 = vmatmul.mubr.f32.gmra.mxu0 %v773
    %v841 = vpop.f32.mrf.mxu0
    %v842 = vadd.f32 0.0, %v841
    %v843 = vpop.f32.mrf.mxu0
    %844 = vmatprep.mubr.f32.mxu0 0.0
    %845 = vmatmul.mubr.f32.gmra.mxu0 %v774
    %v846 = vpop.f32.mrf.mxu0
    %v847 = vadd.f32 0.0, %v846
    %v848 = vpop.f32.mrf.mxu0
    %849 = vdwg.mxu0
    %850 = vmatprep.subr.mxu0 0.0
    %851 = vmatpush1.msra.mxu0 %v79
    %852 = vmatprep.subr.mxu0 0.0
    %853 = vmatpush1.msra.mxu0 %v78
    %854 = vmatprep.subr.mxu0 0.0
    %855 = vmatpush1.msra.mxu0 %v77
    %856 = vmatprep.subr.mxu0 0.0
    %857 = vmatpush1.msra.mxu0 %v76
    %858 = vmatprep.subr.mxu0 0.0
    %859 = vmatpush1.msra.mxu0 %v75
    %860 = vmatprep.subr.mxu0 0.0
    %861 = vmatpush1.msra.mxu0 %v74
    %862 = vmatprep.subr.mxu0 0.0
    %863 = vmatpush1.msra.mxu0 %v73
    %864 = vmatprep.subr.mxu0 0.0
    %865 = vmatpush1.msra.mxu0 %v72
    %866 = vmatprep.subr.mxu0 0.0
    %867 = vmatpush1.msra.mxu0 %v71
    %868 = vmatprep.subr.mxu0 0.0
    %869 = vmatpush1.msra.mxu0 %v70
    %870 = vmatprep.subr.mxu0 0.0
    %871 = vmatpush1.msra.mxu0 %v69
    %872 = vmatprep.subr.mxu0 0.0
    %873 = vmatpush1.msra.mxu0 %v68
    %874 = vmatprep.subr.mxu0 0.0
    %875 = vmatpush1.msra.mxu0 %v67
    %876 = vmatprep.subr.mxu0 0.0
    %877 = vmatpush1.msra.mxu0 %v66
    %878 = vmatprep.subr.mxu0 0.0
    %879 = vmatpush1.msra.mxu0 %v65
    %880 = vmatprep.subr.mxu0 0.0
    %881 = vmatpush1.msra.mxu0 %v64
    %882 = vmatprep.subr.mxu0 0.0
    %883 = vmatpush2.msra.mxu0 0.0
    %884 = vmatprep.subr.mxu0 0.0
    %885 = vmatpush2.msra.mxu0 0.0
    %886 = vmatprep.subr.mxu0 0.0
    %887 = vmatpush2.msra.mxu0 0.0
    %888 = vmatprep.subr.mxu0 0.0
    %889 = vmatpush2.msra.mxu0 0.0
    %890 = vmatprep.subr.mxu0 0.0
    %891 = vmatpush2.msra.mxu0 0.0
    %892 = vmatprep.subr.mxu0 0.0
    %893 = vmatpush2.msra.mxu0 0.0
    %894 = vmatprep.subr.mxu0 0.0
    %895 = vmatpush2.msra.mxu0 0.0
    %896 = vmatprep.subr.mxu0 0.0
    %897 = vmatpush2.msra.mxu0 0.0
    %898 = vmatprep.subr.mxu0 0.0
    %899 = vmatpush2.msra.mxu0 0.0
    %900 = vmatprep.subr.mxu0 0.0
    %901 = vmatpush2.msra.mxu0 0.0
    %902 = vmatprep.subr.mxu0 0.0
    %903 = vmatpush2.msra.mxu0 0.0
    %904 = vmatprep.subr.mxu0 0.0
    %905 = vmatpush2.msra.mxu0 0.0
    %906 = vmatprep.subr.mxu0 0.0
    %907 = vmatpush2.msra.mxu0 0.0
    %908 = vmatprep.subr.mxu0 0.0
    %909 = vmatpush2.msra.mxu0 0.0
    %910 = vmatprep.subr.mxu0 0.0
    %911 = vmatpush2.msra.mxu0 0.0
    %912 = vmatprep.subr.mxu0 0.0
    %913 = vmatpush2.msra.mxu0 0.0
    %914 = vmatprep.mubr.f32.mxu0 0.0
    %915 = vmatmul.mubr.f32.gmra.mxu0 %v769
    %v916 = vpop.f32.mrf.mxu0
    %v917 = vadd.f32 %v842, %v916
    %v918 = vpop.f32.mrf.mxu0
    %919 = vmatprep.mubr.f32.mxu0 0.0
    %920 = vmatmul.mubr.f32.gmra.mxu0 %v770
    %v921 = vpop.f32.mrf.mxu0
    %v922 = vadd.f32 %v847, %v921
    %v923 = vpop.f32.mrf.mxu0
    %924 = vdwg.mxu0
    %s925 = scalar_lea.vmem [#allocation4], 64
    %v926 = vld [vmem:[%s925] sm:$0xff]
    %v927 = vld [vmem:[%s925 + $0x8] sm:$0xff]
    %v928 = vadd.f32 %v917, %v926
    %v929 = vadd.f32 %v922, %v927
    %v930 = vtanh.pop %v928
    %v931 = vtanh.pop %v929
    %v932 = vsub.f32 %v930, %v773
    %v933 = vsub.f32 %v931, %v774
    %v934 = vsub.f32 %v932, %v769
    %v935 = vsub.f32 %v933, %v770
    %v936 = vmul.f32 %v934, 0.05
    %v937 = vmul.f32 %v935, 0.05
    %v938 = vadd.f32 %v769, %v936
    %v939 = vadd.f32 %v770, %v937
    %v940 = vmul.f32 %v938, 0.05
    %v941 = vmul.f32 %v939, 0.05
    %v942 = vadd.f32 %v773, %v940
    %v943 = vadd.f32 %v774, %v941
    %944 = vmatprep.subr.mxu0 0.0
    %945 = vmatpush1.msra.mxu0 %v95
    %946 = vmatprep.subr.mxu0 0.0
    %947 = vmatpush1.msra.mxu0 %v94
    %948 = vmatprep.subr.mxu0 0.0
    %949 = vmatpush1.msra.mxu0 %v93
    %950 = vmatprep.subr.mxu0 0.0
    %951 = vmatpush1.msra.mxu0 %v92
    %952 = vmatprep.subr.mxu0 0.0
    %953 = vmatpush1.msra.mxu0 %v91
    %954 = vmatprep.subr.mxu0 0.0
    %955 = vmatpush1.msra.mxu0 %v90
    %956 = vmatprep.subr.mxu0 0.0
    %957 = vmatpush1.msra.mxu0 %v89
    %958 = vmatprep.subr.mxu0 0.0
    %959 = vmatpush1.msra.mxu0 %v88
    %960 = vmatprep.subr.mxu0 0.0
    %961 = vmatpush1.msra.mxu0 %v87
    %962 = vmatprep.subr.mxu0 0.0
    %963 = vmatpush1.msra.mxu0 %v86
    %964 = vmatprep.subr.mxu0 0.0
    %965 = vmatpush1.msra.mxu0 %v85
    %966 = vmatprep.subr.mxu0 0.0
    %967 = vmatpush1.msra.mxu0 %v84
    %968 = vmatprep.subr.mxu0 0.0
    %969 = vmatpush1.msra.mxu0 %v83
    %970 = vmatprep.subr.mxu0 0.0
    %971 = vmatpush1.msra.mxu0 %v82
    %972 = vmatprep.subr.mxu0 0.0
    %973 = vmatpush1.msra.mxu0 %v81
    %974 = vmatprep.subr.mxu0 0.0
    %975 = vmatpush1.msra.mxu0 %v80
    %976 = vmatprep.subr.mxu0 0.0
    %977 = vmatpush2.msra.mxu0 0.0
    %978 = vmatprep.subr.mxu0 0.0
    %979 = vmatpush2.msra.mxu0 0.0
    %980 = vmatprep.subr.mxu0 0.0
    %981 = vmatpush2.msra.mxu0 0.0
    %982 = vmatprep.subr.mxu0 0.0
    %983 = vmatpush2.msra.mxu0 0.0
    %984 = vmatprep.subr.mxu0 0.0
    %985 = vmatpush2.msra.mxu0 0.0
    %986 = vmatprep.subr.mxu0 0.0
    %987 = vmatpush2.msra.mxu0 0.0
    %988 = vmatprep.subr.mxu0 0.0
    %989 = vmatpush2.msra.mxu0 0.0
    %990 = vmatprep.subr.mxu0 0.0
    %991 = vmatpush2.msra.mxu0 0.0
    %992 = vmatprep.subr.mxu0 0.0
    %993 = vmatpush2.msra.mxu0 0.0
    %994 = vmatprep.subr.mxu0 0.0
    %995 = vmatpush2.msra.mxu0 0.0
    %996 = vmatprep.subr.mxu0 0.0
    %997 = vmatpush2.msra.mxu0 0.0
    %998 = vmatprep.subr.mxu0 0.0
    %999 = vmatpush2.msra.mxu0 0.0
    %1000 = vmatprep.subr.mxu0 0.0
    %1001 = vmatpush2.msra.mxu0 0.0
    %1002 = vmatprep.subr.mxu0 0.0
    %1003 = vmatpush2.msra.mxu0 0.0
    %1004 = vmatprep.subr.mxu0 0.0
    %1005 = vmatpush2.msra.mxu0 0.0
    %1006 = vmatprep.subr.mxu0 0.0
    %1007 = vmatpush2.msra.mxu0 0.0
    %1008 = vmatprep.mubr.f32.mxu0 0.0
    %1009 = vmatmul.mubr.f32.gmra.mxu0 %v942
    %v1010 = vpop.f32.mrf.mxu0
    %v1011 = vadd.f32 0.0, %v1010
    %v1012 = vpop.f32.mrf.mxu0
    %1013 = vmatprep.mubr.f32.mxu0 0.0
    %1014 = vmatmul.mubr.f32.gmra.mxu0 %v943
    %v1015 = vpop.f32.mrf.mxu0
    %v1016 = vadd.f32 0.0, %v1015
    %v1017 = vpop.f32.mrf.mxu0
    %1018 = vdwg.mxu0
    %1019 = vmatprep.subr.mxu0 0.0
    %1020 = vmatpush1.msra.mxu0 %v79
    %1021 = vmatprep.subr.mxu0 0.0
    %1022 = vmatpush1.msra.mxu0 %v78
    %1023 = vmatprep.subr.mxu0 0.0
    %1024 = vmatpush1.msra.mxu0 %v77
    %1025 = vmatprep.subr.mxu0 0.0
    %1026 = vmatpush1.msra.mxu0 %v76
    %1027 = vmatprep.subr.mxu0 0.0
    %1028 = vmatpush1.msra.mxu0 %v75
    %1029 = vmatprep.subr.mxu0 0.0
    %1030 = vmatpush1.msra.mxu0 %v74
    %1031 = vmatprep.subr.mxu0 0.0
    %1032 = vmatpush1.msra.mxu0 %v73
    %1033 = vmatprep.subr.mxu0 0.0
    %1034 = vmatpush1.msra.mxu0 %v72
    %1035 = vmatprep.subr.mxu0 0.0
    %1036 = vmatpush1.msra.mxu0 %v71
    %1037 = vmatprep.subr.mxu0 0.0
    %1038 = vmatpush1.msra.mxu0 %v70
    %1039 = vmatprep.subr.mxu0 0.0
    %1040 = vmatpush1.msra.mxu0 %v69
    %1041 = vmatprep.subr.mxu0 0.0
    %1042 = vmatpush1.msra.mxu0 %v68
    %1043 = vmatprep.subr.mxu0 0.0
    %1044 = vmatpush1.msra.mxu0 %v67
    %1045 = vmatprep.subr.mxu0 0.0
    %1046 = vmatpush1.msra.mxu0 %v66
    %1047 = vmatprep.subr.mxu0 0.0
    %1048 = vmatpush1.msra.mxu0 %v65
    %1049 = vmatprep.subr.mxu0 0.0
    %1050 = vmatpush1.msra.mxu0 %v64
    %1051 = vmatprep.subr.mxu0 0.0
    %1052 = vmatpush2.msra.mxu0 0.0
    %1053 = vmatprep.subr.mxu0 0.0
    %1054 = vmatpush2.msra.mxu0 0.0
    %1055 = vmatprep.subr.mxu0 0.0
    %1056 = vmatpush2.msra.mxu0 0.0
    %1057 = vmatprep.subr.mxu0 0.0
    %1058 = vmatpush2.msra.mxu0 0.0
    %1059 = vmatprep.subr.mxu0 0.0
    %1060 = vmatpush2.msra.mxu0 0.0
    %1061 = vmatprep.subr.mxu0 0.0
    %1062 = vmatpush2.msra.mxu0 0.0
    %1063 = vmatprep.subr.mxu0 0.0
    %1064 = vmatpush2.msra.mxu0 0.0
    %1065 = vmatprep.subr.mxu0 0.0
    %1066 = vmatpush2.msra.mxu0 0.0
    %1067 = vmatprep.subr.mxu0 0.0
    %1068 = vmatpush2.msra.mxu0 0.0
    %1069 = vmatprep.subr.mxu0 0.0
    %1070 = vmatpush2.msra.mxu0 0.0
    %1071 = vmatprep.subr.mxu0 0.0
    %1072 = vmatpush2.msra.mxu0 0.0
    %1073 = vmatprep.subr.mxu0 0.0
    %1074 = vmatpush2.msra.mxu0 0.0
    %1075 = vmatprep.subr.mxu0 0.0
    %1076 = vmatpush2.msra.mxu0 0.0
    %1077 = vmatprep.subr.mxu0 0.0
    %1078 = vmatpush2.msra.mxu0 0.0
    %1079 = vmatprep.subr.mxu0 0.0
    %1080 = vmatpush2.msra.mxu0 0.0
    %1081 = vmatprep.subr.mxu0 0.0
    %1082 = vmatpush2.msra.mxu0 0.0
    %1083 = vmatprep.mubr.f32.mxu0 0.0
    %1084 = vmatmul.mubr.f32.gmra.mxu0 %v938
    %v1085 = vpop.f32.mrf.mxu0
    %v1086 = vadd.f32 %v1011, %v1085
    %v1087 = vpop.f32.mrf.mxu0
    %1088 = vmatprep.mubr.f32.mxu0 0.0
    %1089 = vmatmul.mubr.f32.gmra.mxu0 %v939
    %v1090 = vpop.f32.mrf.mxu0
    %v1091 = vadd.f32 %v1016, %v1090
    %v1092 = vpop.f32.mrf.mxu0
    %1093 = vdwg.mxu0
    %s1094 = scalar_lea.vmem [#allocation4], 80
    %v1095 = vld [vmem:[%s1094] sm:$0xff]
    %v1096 = vld [vmem:[%s1094 + $0x8] sm:$0xff]
    %v1097 = vadd.f32 %v1086, %v1095
    %v1098 = vadd.f32 %v1091, %v1096
    %v1099 = vtanh.pop %v1097
    %v1100 = vtanh.pop %v1098
    %v1101 = vsub.f32 %v1099, %v942
    %v1102 = vsub.f32 %v1100, %v943
    %v1103 = vsub.f32 %v1101, %v938
    %v1104 = vsub.f32 %v1102, %v939
    %v1105 = vmul.f32 %v1103, 0.05
    %v1106 = vmul.f32 %v1104, 0.05
    %v1107 = vadd.f32 %v938, %v1105
    %v1108 = vadd.f32 %v939, %v1106
    %v1109 = vmul.f32 %v1107, 0.05
    %v1110 = vmul.f32 %v1108, 0.05
    %v1111 = vadd.f32 %v942, %v1109
    %v1112 = vadd.f32 %v943, %v1110
    %1113 = vmatprep.subr.mxu0 0.0
    %1114 = vmatpush1.msra.mxu0 %v95
    %1115 = vmatprep.subr.mxu0 0.0
    %1116 = vmatpush1.msra.mxu0 %v94
    %1117 = vmatprep.subr.mxu0 0.0
    %1118 = vmatpush1.msra.mxu0 %v93
    %1119 = vmatprep.subr.mxu0 0.0
    %1120 = vmatpush1.msra.mxu0 %v92
    %1121 = vmatprep.subr.mxu0 0.0
    %1122 = vmatpush1.msra.mxu0 %v91
    %1123 = vmatprep.subr.mxu0 0.0
    %1124 = vmatpush1.msra.mxu0 %v90
    %1125 = vmatprep.subr.mxu0 0.0
    %1126 = vmatpush1.msra.mxu0 %v89
    %1127 = vmatprep.subr.mxu0 0.0
    %1128 = vmatpush1.msra.mxu0 %v88
    %1129 = vmatprep.subr.mxu0 0.0
    %1130 = vmatpush1.msra.mxu0 %v87
    %1131 = vmatprep.subr.mxu0 0.0
    %1132 = vmatpush1.msra.mxu0 %v86
    %1133 = vmatprep.subr.mxu0 0.0
    %1134 = vmatpush1.msra.mxu0 %v85
    %1135 = vmatprep.subr.mxu0 0.0
    %1136 = vmatpush1.msra.mxu0 %v84
    %1137 = vmatprep.subr.mxu0 0.0
    %1138 = vmatpush1.msra.mxu0 %v83
    %1139 = vmatprep.subr.mxu0 0.0
    %1140 = vmatpush1.msra.mxu0 %v82
    %1141 = vmatprep.subr.mxu0 0.0
    %1142 = vmatpush1.msra.mxu0 %v81
    %1143 = vmatprep.subr.mxu0 0.0
    %1144 = vmatpush1.msra.mxu0 %v80
    %1145 = vmatprep.subr.mxu0 0.0
    %1146 = vmatpush2.msra.mxu0 0.0
    %1147 = vmatprep.subr.mxu0 0.0
    %1148 = vmatpush2.msra.mxu0 0.0
    %1149 = vmatprep.subr.mxu0 0.0
    %1150 = vmatpush2.msra.mxu0 0.0
    %1151 = vmatprep.subr.mxu0 0.0
    %1152 = vmatpush2.msra.mxu0 0.0
    %1153 = vmatprep.subr.mxu0 0.0
    %1154 = vmatpush2.msra.mxu0 0.0
    %1155 = vmatprep.subr.mxu0 0.0
    %1156 = vmatpush2.msra.mxu0 0.0
    %1157 = vmatprep.subr.mxu0 0.0
    %1158 = vmatpush2.msra.mxu0 0.0
    %1159 = vmatprep.subr.mxu0 0.0
    %1160 = vmatpush2.msra.mxu0 0.0
    %1161 = vmatprep.subr.mxu0 0.0
    %1162 = vmatpush2.msra.mxu0 0.0
    %1163 = vmatprep.subr.mxu0 0.0
    %1164 = vmatpush2.msra.mxu0 0.0
    %1165 = vmatprep.subr.mxu0 0.0
    %1166 = vmatpush2.msra.mxu0 0.0
    %1167 = vmatprep.subr.mxu0 0.0
    %1168 = vmatpush2.msra.mxu0 0.0
    %1169 = vmatprep.subr.mxu0 0.0
    %1170 = vmatpush2.msra.mxu0 0.0
    %1171 = vmatprep.subr.mxu0 0.0
    %1172 = vmatpush2.msra.mxu0 0.0
    %1173 = vmatprep.subr.mxu0 0.0
    %1174 = vmatpush2.msra.mxu0 0.0
    %1175 = vmatprep.subr.mxu0 0.0
    %1176 = vmatpush2.msra.mxu0 0.0
    %1177 = vmatprep.mubr.f32.mxu0 0.0
    %1178 = vmatmul.mubr.f32.gmra.mxu0 %v1111
    %v1179 = vpop.f32.mrf.mxu0
    %v1180 = vadd.f32 0.0, %v1179
    %v1181 = vpop.f32.mrf.mxu0
    %1182 = vmatprep.mubr.f32.mxu0 0.0
    %1183 = vmatmul.mubr.f32.gmra.mxu0 %v1112
    %v1184 = vpop.f32.mrf.mxu0
    %v1185 = vadd.f32 0.0, %v1184
    %v1186 = vpop.f32.mrf.mxu0
    %1187 = vdwg.mxu0
    %1188 = vmatprep.subr.mxu0 0.0
    %1189 = vmatpush1.msra.mxu0 %v79
    %1190 = vmatprep.subr.mxu0 0.0
    %1191 = vmatpush1.msra.mxu0 %v78
    %1192 = vmatprep.subr.mxu0 0.0
    %1193 = vmatpush1.msra.mxu0 %v77
    %1194 = vmatprep.subr.mxu0 0.0
    %1195 = vmatpush1.msra.mxu0 %v76
    %1196 = vmatprep.subr.mxu0 0.0
    %1197 = vmatpush1.msra.mxu0 %v75
    %1198 = vmatprep.subr.mxu0 0.0
    %1199 = vmatpush1.msra.mxu0 %v74
    %1200 = vmatprep.subr.mxu0 0.0
    %1201 = vmatpush1.msra.mxu0 %v73
    %1202 = vmatprep.subr.mxu0 0.0
    %1203 = vmatpush1.msra.mxu0 %v72
    %1204 = vmatprep.subr.mxu0 0.0
    %1205 = vmatpush1.msra.mxu0 %v71
    %1206 = vmatprep.subr.mxu0 0.0
    %1207 = vmatpush1.msra.mxu0 %v70
    %1208 = vmatprep.subr.mxu0 0.0
    %1209 = vmatpush1.msra.mxu0 %v69
    %1210 = vmatprep.subr.mxu0 0.0
    %1211 = vmatpush1.msra.mxu0 %v68
    %1212 = vmatprep.subr.mxu0 0.0
    %1213 = vmatpush1.msra.mxu0 %v67
    %1214 = vmatprep.subr.mxu0 0.0
    %1215 = vmatpush1.msra.mxu0 %v66
    %1216 = vmatprep.subr.mxu0 0.0
    %1217 = vmatpush1.msra.mxu0 %v65
    %1218 = vmatprep.subr.mxu0 0.0
    %1219 = vmatpush1.msra.mxu0 %v64
    %1220 = vmatprep.subr.mxu0 0.0
    %1221 = vmatpush2.msra.mxu0 0.0
    %1222 = vmatprep.subr.mxu0 0.0
    %1223 = vmatpush2.msra.mxu0 0.0
    %1224 = vmatprep.subr.mxu0 0.0
    %1225 = vmatpush2.msra.mxu0 0.0
    %1226 = vmatprep.subr.mxu0 0.0
    %1227 = vmatpush2.msra.mxu0 0.0
    %1228 = vmatprep.subr.mxu0 0.0
    %1229 = vmatpush2.msra.mxu0 0.0
    %1230 = vmatprep.subr.mxu0 0.0
    %1231 = vmatpush2.msra.mxu0 0.0
    %1232 = vmatprep.subr.mxu0 0.0
    %1233 = vmatpush2.msra.mxu0 0.0
    %1234 = vmatprep.subr.mxu0 0.0
    %1235 = vmatpush2.msra.mxu0 0.0
    %1236 = vmatprep.subr.mxu0 0.0
    %1237 = vmatpush2.msra.mxu0 0.0
    %1238 = vmatprep.subr.mxu0 0.0
    %1239 = vmatpush2.msra.mxu0 0.0
    %1240 = vmatprep.subr.mxu0 0.0
    %1241 = vmatpush2.msra.mxu0 0.0
    %1242 = vmatprep.subr.mxu0 0.0
    %1243 = vmatpush2.msra.mxu0 0.0
    %1244 = vmatprep.subr.mxu0 0.0
    %1245 = vmatpush2.msra.mxu0 0.0
    %1246 = vmatprep.subr.mxu0 0.0
    %1247 = vmatpush2.msra.mxu0 0.0
    %1248 = vmatprep.subr.mxu0 0.0
    %1249 = vmatpush2.msra.mxu0 0.0
    %1250 = vmatprep.subr.mxu0 0.0
    %1251 = vmatpush2.msra.mxu0 0.0
    %1252 = vmatprep.mubr.f32.mxu0 0.0
    %1253 = vmatmul.mubr.f32.gmra.mxu0 %v1107
    %v1254 = vpop.f32.mrf.mxu0
    %v1255 = vadd.f32 %v1180, %v1254
    %v1256 = vpop.f32.mrf.mxu0
    %1257 = vmatprep.mubr.f32.mxu0 0.0
    %1258 = vmatmul.mubr.f32.gmra.mxu0 %v1108
    %v1259 = vpop.f32.mrf.mxu0
    %v1260 = vadd.f32 %v1185, %v1259
    %v1261 = vpop.f32.mrf.mxu0
    %1262 = vdwg.mxu0
    %s1263 = scalar_lea.vmem [#allocation4], 96
    %v1264 = vld [vmem:[%s1263] sm:$0xff]
    %v1265 = vld [vmem:[%s1263 + $0x8] sm:$0xff]
    %v1266 = vadd.f32 %v1255, %v1264
    %v1267 = vadd.f32 %v1260, %v1265
    %v1268 = vtanh.pop %v1266
    %v1269 = vtanh.pop %v1267
    %v1270 = vsub.f32 %v1268, %v1111
    %v1271 = vsub.f32 %v1269, %v1112
    %v1272 = vsub.f32 %v1270, %v1107
    %v1273 = vsub.f32 %v1271, %v1108
    %v1274 = vmul.f32 %v1272, 0.05
    %v1275 = vmul.f32 %v1273, 0.05
    %v1276 = vadd.f32 %v1107, %v1274
    %v1277 = vadd.f32 %v1108, %v1275
    %v1278 = vmul.f32 %v1276, 0.05
    %v1279 = vmul.f32 %v1277, 0.05
    %v1280 = vadd.f32 %v1111, %v1278
    %v1281 = vadd.f32 %v1112, %v1279
    %1282 = vmatprep.subr.mxu0 0.0
    %1283 = vmatpush1.msra.mxu0 %v95
    %1284 = vmatprep.subr.mxu0 0.0
    %1285 = vmatpush1.msra.mxu0 %v94
    %1286 = vmatprep.subr.mxu0 0.0
    %1287 = vmatpush1.msra.mxu0 %v93
    %1288 = vmatprep.subr.mxu0 0.0
    %1289 = vmatpush1.msra.mxu0 %v92
    %1290 = vmatprep.subr.mxu0 0.0
    %1291 = vmatpush1.msra.mxu0 %v91
    %1292 = vmatprep.subr.mxu0 0.0
    %1293 = vmatpush1.msra.mxu0 %v90
    %1294 = vmatprep.subr.mxu0 0.0
    %1295 = vmatpush1.msra.mxu0 %v89
    %1296 = vmatprep.subr.mxu0 0.0
    %1297 = vmatpush1.msra.mxu0 %v88
    %1298 = vmatprep.subr.mxu0 0.0
    %1299 = vmatpush1.msra.mxu0 %v87
    %1300 = vmatprep.subr.mxu0 0.0
    %1301 = vmatpush1.msra.mxu0 %v86
    %1302 = vmatprep.subr.mxu0 0.0
    %1303 = vmatpush1.msra.mxu0 %v85
    %1304 = vmatprep.subr.mxu0 0.0
    %1305 = vmatpush1.msra.mxu0 %v84
    %1306 = vmatprep.subr.mxu0 0.0
    %1307 = vmatpush1.msra.mxu0 %v83
    %1308 = vmatprep.subr.mxu0 0.0
    %1309 = vmatpush1.msra.mxu0 %v82
    %1310 = vmatprep.subr.mxu0 0.0
    %1311 = vmatpush1.msra.mxu0 %v81
    %1312 = vmatprep.subr.mxu0 0.0
    %1313 = vmatpush1.msra.mxu0 %v80
    %1314 = vmatprep.subr.mxu0 0.0
    %1315 = vmatpush2.msra.mxu0 0.0
    %1316 = vmatprep.subr.mxu0 0.0
    %1317 = vmatpush2.msra.mxu0 0.0
    %1318 = vmatprep.subr.mxu0 0.0
    %1319 = vmatpush2.msra.mxu0 0.0
    %1320 = vmatprep.subr.mxu0 0.0
    %1321 = vmatpush2.msra.mxu0 0.0
    %1322 = vmatprep.subr.mxu0 0.0
    %1323 = vmatpush2.msra.mxu0 0.0
    %1324 = vmatprep.subr.mxu0 0.0
    %1325 = vmatpush2.msra.mxu0 0.0
    %1326 = vmatprep.subr.mxu0 0.0
    %1327 = vmatpush2.msra.mxu0 0.0
    %1328 = vmatprep.subr.mxu0 0.0
    %1329 = vmatpush2.msra.mxu0 0.0
    %1330 = vmatprep.subr.mxu0 0.0
    %1331 = vmatpush2.msra.mxu0 0.0
    %1332 = vmatprep.subr.mxu0 0.0
    %1333 = vmatpush2.msra.mxu0 0.0
    %1334 = vmatprep.subr.mxu0 0.0
    %1335 = vmatpush2.msra.mxu0 0.0
    %1336 = vmatprep.subr.mxu0 0.0
    %1337 = vmatpush2.msra.mxu0 0.0
    %1338 = vmatprep.subr.mxu0 0.0
    %1339 = vmatpush2.msra.mxu0 0.0
    %1340 = vmatprep.subr.mxu0 0.0
    %1341 = vmatpush2.msra.mxu0 0.0
    %1342 = vmatprep.subr.mxu0 0.0
    %1343 = vmatpush2.msra.mxu0 0.0
    %1344 = vmatprep.subr.mxu0 0.0
    %1345 = vmatpush2.msra.mxu0 0.0
    %1346 = vmatprep.mubr.f32.mxu0 0.0
    %1347 = vmatmul.mubr.f32.gmra.mxu0 %v1280
    %v1348 = vpop.f32.mrf.mxu0
    %v1349 = vadd.f32 0.0, %v1348
    %v1350 = vpop.f32.mrf.mxu0
    %1351 = vmatprep.mubr.f32.mxu0 0.0
    %1352 = vmatmul.mubr.f32.gmra.mxu0 %v1281
    %v1353 = vpop.f32.mrf.mxu0
    %v1354 = vadd.f32 0.0, %v1353
    %v1355 = vpop.f32.mrf.mxu0
    %1356 = vdwg.mxu0
    %1357 = vmatprep.subr.mxu0 0.0
    %1358 = vmatpush1.msra.mxu0 %v79
    %1359 = vmatprep.subr.mxu0 0.0
    %1360 = vmatpush1.msra.mxu0 %v78
    %1361 = vmatprep.subr.mxu0 0.0
    %1362 = vmatpush1.msra.mxu0 %v77
    %1363 = vmatprep.subr.mxu0 0.0
    %1364 = vmatpush1.msra.mxu0 %v76
    %1365 = vmatprep.subr.mxu0 0.0
    %1366 = vmatpush1.msra.mxu0 %v75
    %1367 = vmatprep.subr.mxu0 0.0
    %1368 = vmatpush1.msra.mxu0 %v74
    %1369 = vmatprep.subr.mxu0 0.0
    %1370 = vmatpush1.msra.mxu0 %v73
    %1371 = vmatprep.subr.mxu0 0.0
    %1372 = vmatpush1.msra.mxu0 %v72
    %1373 = vmatprep.subr.mxu0 0.0
    %1374 = vmatpush1.msra.mxu0 %v71
    %1375 = vmatprep.subr.mxu0 0.0
    %1376 = vmatpush1.msra.mxu0 %v70
    %1377 = vmatprep.subr.mxu0 0.0
    %1378 = vmatpush1.msra.mxu0 %v69
    %1379 = vmatprep.subr.mxu0 0.0
    %1380 = vmatpush1.msra.mxu0 %v68
    %1381 = vmatprep.subr.mxu0 0.0
    %1382 = vmatpush1.msra.mxu0 %v67
    %1383 = vmatprep.subr.mxu0 0.0
    %1384 = vmatpush1.msra.mxu0 %v66
    %1385 = vmatprep.subr.mxu0 0.0
    %1386 = vmatpush1.msra.mxu0 %v65
    %1387 = vmatprep.subr.mxu0 0.0
    %1388 = vmatpush1.msra.mxu0 %v64
    %1389 = vmatprep.subr.mxu0 0.0
    %1390 = vmatpush2.msra.mxu0 0.0
    %1391 = vmatprep.subr.mxu0 0.0
    %1392 = vmatpush2.msra.mxu0 0.0
    %1393 = vmatprep.subr.mxu0 0.0
    %1394 = vmatpush2.msra.mxu0 0.0
    %1395 = vmatprep.subr.mxu0 0.0
    %1396 = vmatpush2.msra.mxu0 0.0
    %1397 = vmatprep.subr.mxu0 0.0
    %1398 = vmatpush2.msra.mxu0 0.0
    %1399 = vmatprep.subr.mxu0 0.0
    %1400 = vmatpush2.msra.mxu0 0.0
    %1401 = vmatprep.subr.mxu0 0.0
    %1402 = vmatpush2.msra.mxu0 0.0
    %1403 = vmatprep.subr.mxu0 0.0
    %1404 = vmatpush2.msra.mxu0 0.0
    %1405 = vmatprep.subr.mxu0 0.0
    %1406 = vmatpush2.msra.mxu0 0.0
    %1407 = vmatprep.subr.mxu0 0.0
    %1408 = vmatpush2.msra.mxu0 0.0
    %1409 = vmatprep.subr.mxu0 0.0
    %1410 = vmatpush2.msra.mxu0 0.0
    %1411 = vmatprep.subr.mxu0 0.0
    %1412 = vmatpush2.msra.mxu0 0.0
    %1413 = vmatprep.subr.mxu0 0.0
    %1414 = vmatpush2.msra.mxu0 0.0
    %1415 = vmatprep.subr.mxu0 0.0
    %1416 = vmatpush2.msra.mxu0 0.0
    %1417 = vmatprep.subr.mxu0 0.0
    %1418 = vmatpush2.msra.mxu0 0.0
    %1419 = vmatprep.subr.mxu0 0.0
    %1420 = vmatpush2.msra.mxu0 0.0
    %1421 = vmatprep.mubr.f32.mxu0 0.0
    %1422 = vmatmul.mubr.f32.gmra.mxu0 %v1276
    %v1423 = vpop.f32.mrf.mxu0
    %v1424 = vadd.f32 %v1349, %v1423
    %v1425 = vpop.f32.mrf.mxu0
    %1426 = vmatprep.mubr.f32.mxu0 0.0
    %1427 = vmatmul.mubr.f32.gmra.mxu0 %v1277
    %v1428 = vpop.f32.mrf.mxu0
    %v1429 = vadd.f32 %v1354, %v1428
    %v1430 = vpop.f32.mrf.mxu0
    %1431 = vdwg.mxu0
    %s1432 = scalar_lea.vmem [#allocation4], 112
    %v1433 = vld [vmem:[%s1432] sm:$0xff]
    %v1434 = vld [vmem:[%s1432 + $0x8] sm:$0xff]
    %v1435 = vadd.f32 %v1424, %v1433
    %v1436 = vadd.f32 %v1429, %v1434
    %v1437 = vtanh.pop %v1435
    %v1438 = vtanh.pop %v1436
    %v1439 = vsub.f32 %v1437, %v1280
    %v1440 = vsub.f32 %v1438, %v1281
    %v1441 = vsub.f32 %v1439, %v1276
    %v1442 = vsub.f32 %v1440, %v1277
    %v1443 = vmul.f32 %v1441, 0.05
    %v1444 = vmul.f32 %v1442, 0.05
    %v1445 = vadd.f32 %v1276, %v1443
    %v1446 = vadd.f32 %v1277, %v1444
    %v1447 = vmul.f32 %v1445, 0.05
    %v1448 = vmul.f32 %v1446, 0.05
    %v1449 = vadd.f32 %v1280, %v1447
    %v1450 = vadd.f32 %v1281, %v1448
    %1451 = vst [vmem:[#allocation2] sm:$0xff] %v1445
    %1452 = vst [vmem:[#allocation2 + $0x8] sm:$0xff] %v1446
    %1453 = vst [vmem:[#allocation3] sm:$0xff] %v1449
    %1454 = vst [vmem:[#allocation3 + $0x8] sm:$0xff] %v1450
    // Predicated region
    $region30: #{tpu_custom_call.1} parent=1 // pred_check
      %p1455 = pneg %p56
    $region31: #{tpu_custom_call.1} parent=1 // pred_check_branch
      %1457 = sbr.rel (%p1455) target = $region33
    $region32: #{tpu_custom_call.1} parent=1 // pred_region
      %1458 = vst [vmem:[#allocation10] sm:$0xff] %v1449
      %1459 = vst [vmem:[#allocation10 + $0x8] sm:$0xff] %v1450
    $region33: #{tpu_custom_call.1} parent=1 // pred_fallthru
      _
    // Predicated region
    $region34: #{tpu_custom_call.1} parent=1 // pred_check
      _
    $region35: #{tpu_custom_call.1} parent=1 // pred_check_branch
      %1461 = sbr.rel (0) target = $region37
    $region36: #{tpu_custom_call.1} parent=1 // pred_region
      %s1463 = ssub.s32 256, 256
      %1464 = vsyncadd [#allocation6], %s1463
      %s1465 = sshll.u32 [#allocation10], 4
      %s1466 = int_to_ptr.vmem [resolvable:$true] %s1465
      %1471 = dma.vmem_to_hbm [thread:$0]  %s1466, 256, %s3, [#allocation6], 128, 128, 8
    $region37: #{tpu_custom_call.1} parent=1 // pred_fallthru
      _
    // Predicated region
    $region38: #{tpu_custom_call.1} parent=1 // pred_check
      _
    $region39: #{tpu_custom_call.1} parent=1 // pred_check_branch
      %1473 = sbr.rel (0) target = $region41
    $region40: #{tpu_custom_call.1} parent=1 // pred_region
      %1474 = dma.done [#allocation6], 256
    $region41: #{tpu_custom_call.1} parent=1 // pred_fallthru
      _
    %1475 = vsyncpa [#allocation5], 1
    %1476 = vsyncpa [#allocation8], 1
    %1477 = vsyncpa [#allocation6], 1

</llo_original>
